<compile_context>
chip_gen: v5e
topology: v5e:2x2
jax: 0.10.0
libtpu: 0.0.40
codegen_flags: <defaults>
</compile_context>

<pallas_src>
import math

import jax
import jax.numpy as jnp
from jax.experimental import pallas as pl
from jax.experimental.pallas import tpu as pltpu

LN_EPS = 1e-12
K_PAD = 8   # padded contraction dim: pos_dim coords + 1 bias column, sublane-aligned


def sinu_pos_kernel(x_ref, w_ref, o_ref):
    """Fused Linear(+bias+phase) -> sin -> LayerNorm (no affine).

    x_ref: (TM, K_PAD)   position rows; column `pos_dim` is the constant-1 bias
                         column, remaining columns are zero.
    w_ref: (K_PAD, D)    rows [0:pos_dim] = omega*W, row pos_dim = omega*b + phase
                         (phase = pi/2 on odd lanes, 0 on even), remaining rows zero.
    o_ref: (TM, D)
    """
    # One MXU matmul; bias + odd-lane phase ride on the constant-1 column. K is
    # tiny so full-f32 contract precision is essentially free.
    pe = jnp.dot(x_ref[...], w_ref[...],
                 preferred_element_type=jnp.float32,
                 precision=jax.lax.Precision.HIGHEST)

    # sin on even lanes, cos on odd lanes — realized as a single sin() because the
    # +pi/2 odd-lane phase was folded into the bias row.
    mix = jnp.sin(pe)

    # LayerNorm over the embedding dim (eps=1e-12, elementwise_affine=False).
    # One-pass moments: var = E[x^2] - mu^2 (safe here, |mix| <= 1).
    inv_d = 1.0 / mix.shape[-1]
    mu = jnp.sum(mix, axis=-1, keepdims=True) * inv_d
    ex2 = jnp.sum(mix * mix, axis=-1, keepdims=True) * inv_d
    var = ex2 - mu * mu
    o_ref[...] = (mix - mu) * jax.lax.rsqrt(var + LN_EPS)


def learned_sinu_pos_embedder(pos_normed, w, b, *, omega=1.0, tm=512):
    """pos_normed: (B, N, pos_dim); w: (pos_dim, D) (== PyTorch pos_fc.weight.T); b: (D,)."""
    bsz, n, pos_dim = pos_normed.shape
    d = w.shape[1]
    assert w.shape[0] == pos_dim and b.shape == (d,)
    assert d % 2 == 0 and d % 128 == 0, "pos_embed_dim kept lane-dense (multiple of 128)"
    assert pos_dim + 1 <= K_PAD
    omega = float(omega)   # static; folded into the parameter slab below

    rows = bsz * n
    # Row tile: sublane-aligned, capped at `tm`; rows padded to a multiple of TM so
    # every grid step sees a full, unmasked block.
    tm = max(8, min(tm, ((rows + 7) // 8) * 8))
    rows_pad = ((rows + tm - 1) // tm) * tm
    grid = rows_pad // tm

    # Input slab: real coords in cols [0:pos_dim], constant-1 bias column at `pos_dim`,
    # zeros elsewhere. Only K_PAD=8 lanes wide -> negligible padding traffic.
    x = jnp.zeros((rows_pad, K_PAD), jnp.float32)
    x = x.at[:rows, :pos_dim].set(pos_normed.reshape(rows, pos_dim).astype(jnp.float32))
    x = x.at[:rows, pos_dim].set(1.0)

    # Parameter slab with omega and the odd-lane +pi/2 phase folded in:
    #   sin(x @ (omega*W) + omega*b + phase) == interleaved sin/cos of omega*pe0.
    phase = jnp.where(jnp.arange(d) % 2 == 1,
                      jnp.float32(0.5 * math.pi), jnp.float32(0.0))
    w_slab = jnp.zeros((K_PAD, d), jnp.float32)
    w_slab = w_slab.at[:pos_dim].set(omega * w.astype(jnp.float32))
    w_slab = w_slab.at[pos_dim].set(omega * b.astype(jnp.float32) + phase)

    out = pl.pallas_call(
        sinu_pos_kernel,
        out_shape=jax.ShapeDtypeStruct((rows_pad, d), jnp.float32),
        grid=(grid,),
        in_specs=[pl.BlockSpec((tm, K_PAD), lambda i: (i, 0)),
                  pl.BlockSpec((K_PAD, d), lambda i: (0, 0))],   # constant -> stays VMEM-resident
        out_specs=pl.BlockSpec((tm, d), lambda i: (i, 0)),
        compiler_params=pltpu.CompilerParams(dimension_semantics=("parallel",)),
    )(x, w_slab)

    if rows_pad != rows:
        out = out[:rows]
    return out.reshape(bsz, n, d)


def reference(pos_normed, w, b, omega):
    """Pure-JAX transcription of the PyTorch forward (for the correctness check)."""
    pe0 = jnp.einsum("bnp,pd->bnd", pos_normed, w,
                     precision=jax.lax.Precision.HIGHEST) + b
    sin = jnp.sin(omega * pe0[:, :, 0::2])
    cos = jnp.cos(omega * pe0[:, :, 1::2])
    mix = jnp.stack((sin, cos), axis=3).reshape(pe0.shape)
    mu = jnp.mean(mix, axis=-1, keepdims=True)
    var = jnp.mean((mix - mu) ** 2, axis=-1, keepdims=True)
    return (mix - mu) / jnp.sqrt(var + LN_EPS)


if __name__ == "__main__":
    key = jax.random.PRNGKey(0)
    k_pos, k_w, k_b = jax.random.split(key, 3)

    B, N, POS_DIM, EMBED_DIM = 2, 16, 3, 256   # 16 positions per batch, 3-D normalized coords
    pos_normed = jax.random.uniform(k_pos, (B, N, POS_DIM), jnp.float32, -1.0, 1.0)
    w = 0.5 * jax.random.normal(k_w, (POS_DIM, EMBED_DIM), jnp.float32)   # pos_fc.weight.T
    b = 0.5 * jax.random.normal(k_b, (EMBED_DIM,), jnp.float32)           # pos_fc.bias

    out = learned_sinu_pos_embedder(pos_normed, w, b, omega=1.0)
    jax.block_until_ready(out)
    assert out.shape == (B, N, EMBED_DIM)

    ref = reference(pos_normed, w, b, 1.0)
    # Full-f32 matmul precision in the kernel -> tight agreement with the reference.
    assert jnp.allclose(out, ref, atol=2e-3, rtol=2e-3), float(jnp.max(jnp.abs(out - ref)))
    print("KERNEL_OK")
</pallas_src>

<mosaic_0001>
module attributes {stable_mosaic.version = 11 : i64} {
  func.func @sinu_pos_kernel(%arg0: i32, %arg1: memref<32x8xf32, #tpu.memory_space<vmem>>, %arg2: memref<8x256xf32, #tpu.memory_space<vmem>>, %arg3: memref<32x256xf32, #tpu.memory_space<vmem>>) attributes {dimension_semantics = [#tpu.dimension_semantics<parallel>], iteration_bounds = array<i64: 1>, scalar_prefetch = 0 : i64, scratch_operands = 0 : i64, tpu.core_type = #tpu.core_type<tc>, window_params = [{transform_indices = @transform_0, window_bounds = array<i64: 32, 8>}, {pipeline_mode = #tpu.pipeline_mode<synchronous>, transform_indices = @transform_1, window_bounds = array<i64: 8, 256>}, {transform_indices = @transform_2, window_bounds = array<i64: 32, 256>}]} {
    %c0 = arith.constant 0 : index
    %c0_0 = arith.constant 0 : index
    %0 = vector.load %arg1[%c0, %c0_0] : memref<32x8xf32, #tpu.memory_space<vmem>>, vector<32x8xf32>
    %c0_1 = arith.constant 0 : index
    %c0_2 = arith.constant 0 : index
    %1 = vector.load %arg2[%c0_1, %c0_2] : memref<8x256xf32, #tpu.memory_space<vmem>>, vector<8x256xf32>
    %cst = arith.constant dense<0.000000e+00> : vector<32x256xf32>
    %2 = tpu.matmul %0, %1, %cst {dimension_numbers = #tpu.dot_dimension_numbers<[1], [0], [0], [1], [0, 0, 1, 1], [], []>, precision = #tpu.contract_precision<fp32>} : vector<32x8xf32>, vector<8x256xf32>, vector<32x256xf32> -> vector<32x256xf32>
    %3 = math.sin %2 : vector<32x256xf32>
    %cst_3 = arith.constant dense<0.000000e+00> : vector<32xf32>
    %4 = vector.multi_reduction <add>, %3, %cst_3 [1] : vector<32x256xf32> to vector<32xf32>
    %5 = vector.shape_cast %4 : vector<32xf32> to vector<32x1xf32>
    %cst_4 = arith.constant 3.906250e-03 : f32
    %6 = vector.broadcast %cst_4 : f32 to vector<32x1xf32>
    %7 = arith.mulf %5, %6 : vector<32x1xf32>
    %8 = arith.mulf %3, %3 : vector<32x256xf32>
    %cst_5 = arith.constant dense<0.000000e+00> : vector<32xf32>
    %9 = vector.multi_reduction <add>, %8, %cst_5 [1] : vector<32x256xf32> to vector<32xf32>
    %10 = vector.shape_cast %9 : vector<32xf32> to vector<32x1xf32>
    %cst_6 = arith.constant 3.906250e-03 : f32
    %11 = vector.broadcast %cst_6 : f32 to vector<32x1xf32>
    %12 = arith.mulf %10, %11 : vector<32x1xf32>
    %13 = arith.mulf %7, %7 : vector<32x1xf32>
    %14 = arith.subf %12, %13 : vector<32x1xf32>
    %15 = vector.broadcast %7 : vector<32x1xf32> to vector<32x256xf32>
    %16 = arith.subf %3, %15 : vector<32x256xf32>
    %cst_7 = arith.constant 9.99999996E-13 : f32
    %17 = vector.broadcast %cst_7 : f32 to vector<32x1xf32>
    %18 = arith.addf %14, %17 : vector<32x1xf32>
    %19 = math.rsqrt %18 : vector<32x1xf32>
    %20 = vector.broadcast %19 : vector<32x1xf32> to vector<32x256xf32>
    %21 = arith.mulf %16, %20 : vector<32x256xf32>
    %c0_8 = arith.constant 0 : index
    %c0_9 = arith.constant 0 : index
    %22 = vector.load %arg3[%c0_8, %c0_9] : memref<32x256xf32, #tpu.memory_space<vmem>>, vector<32x256xf32>
    tpu.vector_store %arg3[%c0_8, %c0_9], %21 {strides = array<i32>} : memref<32x256xf32, #tpu.memory_space<vmem>>, vector<32x256xf32>,
    return
  }
  func.func @transform_0(%arg0: i32) -> (i32, i32) {
    %c0_i32 = arith.constant 0 : i32
    %c0_i32_0 = arith.constant 0 : i32
    return %arg0, %c0_i32 : i32, i32
  }
  func.func @transform_1(%arg0: i32) -> (i32, i32) {
    %c0_i32 = arith.constant 0 : i32
    %c0_i32_0 = arith.constant 0 : i32
    %c0_i32_1 = arith.constant 0 : i32
    return %c0_i32, %c0_i32_0 : i32, i32
  }
  func.func @transform_2(%arg0: i32) -> (i32, i32) {
    %c0_i32 = arith.constant 0 : i32
    %c0_i32_0 = arith.constant 0 : i32
    return %arg0, %c0_i32 : i32, i32
  }
}

</mosaic_0001>

<llo_original>
// kernel: tpu_custom_call.1
$region0: #{tpu_custom_call.1}
  #allocation0 [shape = 'u32[]', space=smem, size = 0x4, offset = 0x4, fixed_abs, tag = 'smem constant byte address 0x4 - core index']
  #allocation1 [shape = 'u32[72,128]{1,0:T(1,128)}', space=vmem, size = 0x9000, scoped, tag = 'internal scratch']
  %s0 = inlined_call_operand.vmem [shape: f32[32,8], index: 0, kind: input, shape index: {}]
  %s1 = inlined_call_operand.vmem [shape: f32[8,256], index: 1, kind: input, shape index: {}]
  %s2 = inlined_call_operand.hbm [shape: f32[32,256], index: 2, kind: output, shape index: {}]
  %s3 = sld [smem:[#allocation0]]
  $region18: #{tpu_custom_call.1} parent=0
    _
  %s5 = ssub.s32 1, %s3
  %s6 = scalar_select 0, %s5, %s3
  $region1: #{tpu_custom_call.1} parent=0
    #allocation2 [shape = 'u8[32768]{0}', space=vmem, size = 0x8000, scoped, tag = 'output window, operand 0, single buffered']
    #allocation3 [shape = 's32[1]{0}', space=sflag, size = 0x4, scoped, tag = 'scoped memory for tpu_custom_call.1']
    %7 = vsyncpa [#allocation3], 0
    // Predicated region
    $region2: #{tpu_custom_call.1} parent=1 // pred_check
      _
    $region3: #{tpu_custom_call.1} parent=1 // pred_check_branch
      %9 = sbr.rel (0) target = $region5
    $region4: #{tpu_custom_call.1} parent=1 // pred_region
      _
    $region5: #{tpu_custom_call.1} parent=1 // pred_fallthru
      _
    // Predicated region
    $region6: #{tpu_custom_call.1} parent=1 // pred_check
      _
    $region7: #{tpu_custom_call.1} parent=1 // pred_check_branch
      %11 = sbr.rel (0) target = $region9
    $region8: #{tpu_custom_call.1} parent=1 // pred_region
      _
    $region9: #{tpu_custom_call.1} parent=1 // pred_fallthru
      _
    %v12 = vld [vmem:[%s0] sm:$0xff]
    %v13 = vld [vmem:[%s0 + $0x8] sm:$0xff]
    %v14 = vld [vmem:[%s0 + $0x10] sm:$0xff]
    %v15 = vld [vmem:[%s0 + $0x18] sm:$0xff]
    %v16 = vld [vmem:[%s1] sm:$0xff]
    %v17 = vld [vmem:[%s1 + $0x8] sm:$0xff]
    %vm18 = vcmask 64512
    %v20 = vsel %vm18, %v12, 0
    %v23 = vsel %vm18, %v13, 0
    %v26 = vsel %vm18, %v14, 0
    %v29 = vsel %vm18, %v15, 0
    %31 = vmatpush.msra.mxu0 0.0
    %32 = vmatpush.msra.mxu0 0.0
    %33 = vmatpush.msra.mxu0 0.0
    %34 = vmatpush.msra.mxu0 0.0
    %35 = vmatpush.msra.mxu0 0.0
    %36 = vmatpush.msra.mxu0 0.0
    %37 = vmatpush.msra.mxu0 0.0
    %38 = vmatpush.msra.mxu0 0.0
    %39 = vmatpush.msra.mxu0 0.0
    %40 = vmatpush.msra.mxu0 0.0
    %41 = vmatpush.msra.mxu0 0.0
    %42 = vmatpush.msra.mxu0 0.0
    %43 = vmatpush.msra.mxu0 0.0
    %44 = vmatpush.msra.mxu0 0.0
    %45 = vmatpush.msra.mxu0 0.0
    %v46 = vand.u32 %v16, 4294901760
    %47 = vmatpush.msra.mxu0 %v46
    %v48 = vand.u32 %v20, 4294901760
    %v49 = vsub.f32 %v20, %v48
    %v50 = vand.u32 %v49, 4294901760
    %v51 = vsub.f32 %v49, %v50
    %v52 = vand.u32 %v51, 4294901760
    %53 = vmatmul.f32.gmra.mxu0 %v52
    %v54 = vpop.f32.mrf.mxu0
    %v55 = vadd.f32 0.0, %v54
    %v56 = vand.u32 %v23, 4294901760
    %v57 = vsub.f32 %v23, %v56
    %v58 = vand.u32 %v57, 4294901760
    %v59 = vsub.f32 %v57, %v58
    %v60 = vand.u32 %v59, 4294901760
    %61 = vmatmul.f32.gmra.mxu0 %v60
    %v62 = vpop.f32.mrf.mxu0
    %v63 = vadd.f32 0.0, %v62
    %v64 = vand.u32 %v26, 4294901760
    %v65 = vsub.f32 %v26, %v64
    %v66 = vand.u32 %v65, 4294901760
    %v67 = vsub.f32 %v65, %v66
    %v68 = vand.u32 %v67, 4294901760
    %69 = vmatmul.f32.gmra.mxu0 %v68
    %v70 = vpop.f32.mrf.mxu0
    %v71 = vadd.f32 0.0, %v70
    %v72 = vand.u32 %v29, 4294901760
    %v73 = vsub.f32 %v29, %v72
    %v74 = vand.u32 %v73, 4294901760
    %v75 = vsub.f32 %v73, %v74
    %v76 = vand.u32 %v75, 4294901760
    %77 = vmatmul.f32.gmra.mxu0 %v76
    %v78 = vpop.f32.mrf.mxu0
    %v79 = vadd.f32 0.0, %v78
    %80 = vdwg.mxu0
    %81 = vmatpush.msra.mxu0 0.0
    %82 = vmatpush.msra.mxu0 0.0
    %83 = vmatpush.msra.mxu0 0.0
    %84 = vmatpush.msra.mxu0 0.0
    %85 = vmatpush.msra.mxu0 0.0
    %86 = vmatpush.msra.mxu0 0.0
    %87 = vmatpush.msra.mxu0 0.0
    %88 = vmatpush.msra.mxu0 0.0
    %89 = vmatpush.msra.mxu0 0.0
    %90 = vmatpush.msra.mxu0 0.0
    %91 = vmatpush.msra.mxu0 0.0
    %92 = vmatpush.msra.mxu0 0.0
    %93 = vmatpush.msra.mxu0 0.0
    %94 = vmatpush.msra.mxu0 0.0
    %95 = vmatpush.msra.mxu0 0.0
    %v96 = vand.u32 %v16, 4294901760
    %v97 = vsub.f32 %v16, %v96
    %v98 = vand.u32 %v97, 4294901760
    %v99 = vsub.f32 %v97, %v98
    %v100 = vand.u32 %v99, 4294901760
    %101 = vmatpush.msra.mxu0 %v100
    %v102 = vand.u32 %v20, 4294901760
    %103 = vmatmul.f32.gmra.mxu0 %v102
    %v104 = vpop.f32.mrf.mxu0
    %v105 = vadd.f32 %v55, %v104
    %v106 = vand.u32 %v23, 4294901760
    %107 = vmatmul.f32.gmra.mxu0 %v106
    %v108 = vpop.f32.mrf.mxu0
    %v109 = vadd.f32 %v63, %v108
    %v110 = vand.u32 %v26, 4294901760
    %111 = vmatmul.f32.gmra.mxu0 %v110
    %v112 = vpop.f32.mrf.mxu0
    %v113 = vadd.f32 %v71, %v112
    %v114 = vand.u32 %v29, 4294901760
    %115 = vmatmul.f32.gmra.mxu0 %v114
    %v116 = vpop.f32.mrf.mxu0
    %v117 = vadd.f32 %v79, %v116
    %118 = vdwg.mxu0
    %119 = vmatpush.msra.mxu0 0.0
    %120 = vmatpush.msra.mxu0 0.0
    %121 = vmatpush.msra.mxu0 0.0
    %122 = vmatpush.msra.mxu0 0.0
    %123 = vmatpush.msra.mxu0 0.0
    %124 = vmatpush.msra.mxu0 0.0
    %125 = vmatpush.msra.mxu0 0.0
    %126 = vmatpush.msra.mxu0 0.0
    %127 = vmatpush.msra.mxu0 0.0
    %128 = vmatpush.msra.mxu0 0.0
    %129 = vmatpush.msra.mxu0 0.0
    %130 = vmatpush.msra.mxu0 0.0
    %131 = vmatpush.msra.mxu0 0.0
    %132 = vmatpush.msra.mxu0 0.0
    %133 = vmatpush.msra.mxu0 0.0
    %v134 = vand.u32 %v16, 4294901760
    %v135 = vsub.f32 %v16, %v134
    %136 = vmatpush.msra.mxu0 %v135
    %v137 = vand.u32 %v20, 4294901760
    %v138 = vsub.f32 %v20, %v137
    %139 = vmatmul.f32.gmra.mxu0 %v138
    %v140 = vpop.f32.mrf.mxu0
    %v141 = vadd.f32 %v105, %v140
    %v142 = vand.u32 %v23, 4294901760
    %v143 = vsub.f32 %v23, %v142
    %144 = vmatmul.f32.gmra.mxu0 %v143
    %v145 = vpop.f32.mrf.mxu0
    %v146 = vadd.f32 %v109, %v145
    %v147 = vand.u32 %v26, 4294901760
    %v148 = vsub.f32 %v26, %v147
    %149 = vmatmul.f32.gmra.mxu0 %v148
    %v150 = vpop.f32.mrf.mxu0
    %v151 = vadd.f32 %v113, %v150
    %v152 = vand.u32 %v29, 4294901760
    %v153 = vsub.f32 %v29, %v152
    %154 = vmatmul.f32.gmra.mxu0 %v153
    %v155 = vpop.f32.mrf.mxu0
    %v156 = vadd.f32 %v117, %v155
    %157 = vdwg.mxu0
    %158 = vmatpush.msra.mxu0 0.0
    %159 = vmatpush.msra.mxu0 0.0
    %160 = vmatpush.msra.mxu0 0.0
    %161 = vmatpush.msra.mxu0 0.0
    %162 = vmatpush.msra.mxu0 0.0
    %163 = vmatpush.msra.mxu0 0.0
    %164 = vmatpush.msra.mxu0 0.0
    %165 = vmatpush.msra.mxu0 0.0
    %166 = vmatpush.msra.mxu0 0.0
    %167 = vmatpush.msra.mxu0 0.0
    %168 = vmatpush.msra.mxu0 0.0
    %169 = vmatpush.msra.mxu0 0.0
    %170 = vmatpush.msra.mxu0 0.0
    %171 = vmatpush.msra.mxu0 0.0
    %172 = vmatpush.msra.mxu0 0.0
    %v173 = vand.u32 %v16, 4294901760
    %174 = vmatpush.msra.mxu0 %v173
    %v175 = vand.u32 %v20, 4294901760
    %v176 = vsub.f32 %v20, %v175
    %v177 = vand.u32 %v176, 4294901760
    %178 = vmatmul.f32.gmra.mxu0 %v177
    %v179 = vpop.f32.mrf.mxu0
    %v180 = vadd.f32 %v141, %v179
    %v181 = vand.u32 %v23, 4294901760
    %v182 = vsub.f32 %v23, %v181
    %v183 = vand.u32 %v182, 4294901760
    %184 = vmatmul.f32.gmra.mxu0 %v183
    %v185 = vpop.f32.mrf.mxu0
    %v186 = vadd.f32 %v146, %v185
    %v187 = vand.u32 %v26, 4294901760
    %v188 = vsub.f32 %v26, %v187
    %v189 = vand.u32 %v188, 4294901760
    %190 = vmatmul.f32.gmra.mxu0 %v189
    %v191 = vpop.f32.mrf.mxu0
    %v192 = vadd.f32 %v151, %v191
    %v193 = vand.u32 %v29, 4294901760
    %v194 = vsub.f32 %v29, %v193
    %v195 = vand.u32 %v194, 4294901760
    %196 = vmatmul.f32.gmra.mxu0 %v195
    %v197 = vpop.f32.mrf.mxu0
    %v198 = vadd.f32 %v156, %v197
    %199 = vdwg.mxu0
    %200 = vmatpush.msra.mxu0 0.0
    %201 = vmatpush.msra.mxu0 0.0
    %202 = vmatpush.msra.mxu0 0.0
    %203 = vmatpush.msra.mxu0 0.0
    %204 = vmatpush.msra.mxu0 0.0
    %205 = vmatpush.msra.mxu0 0.0
    %206 = vmatpush.msra.mxu0 0.0
    %207 = vmatpush.msra.mxu0 0.0
    %208 = vmatpush.msra.mxu0 0.0
    %209 = vmatpush.msra.mxu0 0.0
    %210 = vmatpush.msra.mxu0 0.0
    %211 = vmatpush.msra.mxu0 0.0
    %212 = vmatpush.msra.mxu0 0.0
    %213 = vmatpush.msra.mxu0 0.0
    %214 = vmatpush.msra.mxu0 0.0
    %v215 = vand.u32 %v16, 4294901760
    %v216 = vsub.f32 %v16, %v215
    %v217 = vand.u32 %v216, 4294901760
    %218 = vmatpush.msra.mxu0 %v217
    %v219 = vand.u32 %v20, 4294901760
    %220 = vmatmul.f32.gmra.mxu0 %v219
    %v221 = vpop.f32.mrf.mxu0
    %v222 = vadd.f32 %v180, %v221
    %v223 = vand.u32 %v23, 4294901760
    %224 = vmatmul.f32.gmra.mxu0 %v223
    %v225 = vpop.f32.mrf.mxu0
    %v226 = vadd.f32 %v186, %v225
    %v227 = vand.u32 %v26, 4294901760
    %228 = vmatmul.f32.gmra.mxu0 %v227
    %v229 = vpop.f32.mrf.mxu0
    %v230 = vadd.f32 %v192, %v229
    %v231 = vand.u32 %v29, 4294901760
    %232 = vmatmul.f32.gmra.mxu0 %v231
    %v233 = vpop.f32.mrf.mxu0
    %v234 = vadd.f32 %v198, %v233
    %235 = vdwg.mxu0
    %236 = vmatpush.msra.mxu0 0.0
    %237 = vmatpush.msra.mxu0 0.0
    %238 = vmatpush.msra.mxu0 0.0
    %239 = vmatpush.msra.mxu0 0.0
    %240 = vmatpush.msra.mxu0 0.0
    %241 = vmatpush.msra.mxu0 0.0
    %242 = vmatpush.msra.mxu0 0.0
    %243 = vmatpush.msra.mxu0 0.0
    %244 = vmatpush.msra.mxu0 0.0
    %245 = vmatpush.msra.mxu0 0.0
    %246 = vmatpush.msra.mxu0 0.0
    %247 = vmatpush.msra.mxu0 0.0
    %248 = vmatpush.msra.mxu0 0.0
    %249 = vmatpush.msra.mxu0 0.0
    %250 = vmatpush.msra.mxu0 0.0
    %v251 = vand.u32 %v16, 4294901760
    %252 = vmatpush.msra.mxu0 %v251
    %v253 = vand.u32 %v20, 4294901760
    %254 = vmatmul.f32.gmra.mxu0 %v253
    %v255 = vpop.f32.mrf.mxu0
    %v256 = vadd.f32 %v222, %v255
    %v257 = vand.u32 %v23, 4294901760
    %258 = vmatmul.f32.gmra.mxu0 %v257
    %v259 = vpop.f32.mrf.mxu0
    %v260 = vadd.f32 %v226, %v259
    %v261 = vand.u32 %v26, 4294901760
    %262 = vmatmul.f32.gmra.mxu0 %v261
    %v263 = vpop.f32.mrf.mxu0
    %v264 = vadd.f32 %v230, %v263
    %v265 = vand.u32 %v29, 4294901760
    %266 = vmatmul.f32.gmra.mxu0 %v265
    %v267 = vpop.f32.mrf.mxu0
    %v268 = vadd.f32 %v234, %v267
    %269 = vdwg.mxu0
    %270 = vmatpush.msra.mxu0 0.0
    %271 = vmatpush.msra.mxu0 0.0
    %272 = vmatpush.msra.mxu0 0.0
    %273 = vmatpush.msra.mxu0 0.0
    %274 = vmatpush.msra.mxu0 0.0
    %275 = vmatpush.msra.mxu0 0.0
    %276 = vmatpush.msra.mxu0 0.0
    %277 = vmatpush.msra.mxu0 0.0
    %278 = vmatpush.msra.mxu0 0.0
    %279 = vmatpush.msra.mxu0 0.0
    %280 = vmatpush.msra.mxu0 0.0
    %281 = vmatpush.msra.mxu0 0.0
    %282 = vmatpush.msra.mxu0 0.0
    %283 = vmatpush.msra.mxu0 0.0
    %284 = vmatpush.msra.mxu0 0.0
    %v285 = vand.u32 %v17, 4294901760
    %286 = vmatpush.msra.mxu0 %v285
    %v287 = vand.u32 %v20, 4294901760
    %v288 = vsub.f32 %v20, %v287
    %v289 = vand.u32 %v288, 4294901760
    %v290 = vsub.f32 %v288, %v289
    %v291 = vand.u32 %v290, 4294901760
    %292 = vmatmul.f32.gmra.mxu0 %v291
    %v293 = vpop.f32.mrf.mxu0
    %v294 = vadd.f32 0.0, %v293
    %v295 = vand.u32 %v23, 4294901760
    %v296 = vsub.f32 %v23, %v295
    %v297 = vand.u32 %v296, 4294901760
    %v298 = vsub.f32 %v296, %v297
    %v299 = vand.u32 %v298, 4294901760
    %300 = vmatmul.f32.gmra.mxu0 %v299
    %v301 = vpop.f32.mrf.mxu0
    %v302 = vadd.f32 0.0, %v301
    %v303 = vand.u32 %v26, 4294901760
    %v304 = vsub.f32 %v26, %v303
    %v305 = vand.u32 %v304, 4294901760
    %v306 = vsub.f32 %v304, %v305
    %v307 = vand.u32 %v306, 4294901760
    %308 = vmatmul.f32.gmra.mxu0 %v307
    %v309 = vpop.f32.mrf.mxu0
    %v310 = vadd.f32 0.0, %v309
    %v311 = vand.u32 %v29, 4294901760
    %v312 = vsub.f32 %v29, %v311
    %v313 = vand.u32 %v312, 4294901760
    %v314 = vsub.f32 %v312, %v313
    %v315 = vand.u32 %v314, 4294901760
    %316 = vmatmul.f32.gmra.mxu0 %v315
    %v317 = vpop.f32.mrf.mxu0
    %v318 = vadd.f32 0.0, %v317
    %319 = vdwg.mxu0
    %320 = vmatpush.msra.mxu0 0.0
    %321 = vmatpush.msra.mxu0 0.0
    %322 = vmatpush.msra.mxu0 0.0
    %323 = vmatpush.msra.mxu0 0.0
    %324 = vmatpush.msra.mxu0 0.0
    %325 = vmatpush.msra.mxu0 0.0
    %326 = vmatpush.msra.mxu0 0.0
    %327 = vmatpush.msra.mxu0 0.0
    %328 = vmatpush.msra.mxu0 0.0
    %329 = vmatpush.msra.mxu0 0.0
    %330 = vmatpush.msra.mxu0 0.0
    %331 = vmatpush.msra.mxu0 0.0
    %332 = vmatpush.msra.mxu0 0.0
    %333 = vmatpush.msra.mxu0 0.0
    %334 = vmatpush.msra.mxu0 0.0
    %v335 = vand.u32 %v17, 4294901760
    %v336 = vsub.f32 %v17, %v335
    %v337 = vand.u32 %v336, 4294901760
    %v338 = vsub.f32 %v336, %v337
    %v339 = vand.u32 %v338, 4294901760
    %340 = vmatpush.msra.mxu0 %v339
    %v341 = vand.u32 %v20, 4294901760
    %342 = vmatmul.f32.gmra.mxu0 %v341
    %v343 = vpop.f32.mrf.mxu0
    %v344 = vadd.f32 %v294, %v343
    %v345 = vand.u32 %v23, 4294901760
    %346 = vmatmul.f32.gmra.mxu0 %v345
    %v347 = vpop.f32.mrf.mxu0
    %v348 = vadd.f32 %v302, %v347
    %v349 = vand.u32 %v26, 4294901760
    %350 = vmatmul.f32.gmra.mxu0 %v349
    %v351 = vpop.f32.mrf.mxu0
    %v352 = vadd.f32 %v310, %v351
    %v353 = vand.u32 %v29, 4294901760
    %354 = vmatmul.f32.gmra.mxu0 %v353
    %v355 = vpop.f32.mrf.mxu0
    %v356 = vadd.f32 %v318, %v355
    %357 = vdwg.mxu0
    %358 = vmatpush.msra.mxu0 0.0
    %359 = vmatpush.msra.mxu0 0.0
    %360 = vmatpush.msra.mxu0 0.0
    %361 = vmatpush.msra.mxu0 0.0
    %362 = vmatpush.msra.mxu0 0.0
    %363 = vmatpush.msra.mxu0 0.0
    %364 = vmatpush.msra.mxu0 0.0
    %365 = vmatpush.msra.mxu0 0.0
    %366 = vmatpush.msra.mxu0 0.0
    %367 = vmatpush.msra.mxu0 0.0
    %368 = vmatpush.msra.mxu0 0.0
    %369 = vmatpush.msra.mxu0 0.0
    %370 = vmatpush.msra.mxu0 0.0
    %371 = vmatpush.msra.mxu0 0.0
    %372 = vmatpush.msra.mxu0 0.0
    %v373 = vand.u32 %v17, 4294901760
    %v374 = vsub.f32 %v17, %v373
    %375 = vmatpush.msra.mxu0 %v374
    %v376 = vand.u32 %v20, 4294901760
    %v377 = vsub.f32 %v20, %v376
    %378 = vmatmul.f32.gmra.mxu0 %v377
    %v379 = vpop.f32.mrf.mxu0
    %v380 = vadd.f32 %v344, %v379
    %v381 = vand.u32 %v23, 4294901760
    %v382 = vsub.f32 %v23, %v381
    %383 = vmatmul.f32.gmra.mxu0 %v382
    %v384 = vpop.f32.mrf.mxu0
    %v385 = vadd.f32 %v348, %v384
    %v386 = vand.u32 %v26, 4294901760
    %v387 = vsub.f32 %v26, %v386
    %388 = vmatmul.f32.gmra.mxu0 %v387
    %v389 = vpop.f32.mrf.mxu0
    %v390 = vadd.f32 %v352, %v389
    %v391 = vand.u32 %v29, 4294901760
    %v392 = vsub.f32 %v29, %v391
    %393 = vmatmul.f32.gmra.mxu0 %v392
    %v394 = vpop.f32.mrf.mxu0
    %v395 = vadd.f32 %v356, %v394
    %396 = vdwg.mxu0
    %397 = vmatpush.msra.mxu0 0.0
    %398 = vmatpush.msra.mxu0 0.0
    %399 = vmatpush.msra.mxu0 0.0
    %400 = vmatpush.msra.mxu0 0.0
    %401 = vmatpush.msra.mxu0 0.0
    %402 = vmatpush.msra.mxu0 0.0
    %403 = vmatpush.msra.mxu0 0.0
    %404 = vmatpush.msra.mxu0 0.0
    %405 = vmatpush.msra.mxu0 0.0
    %406 = vmatpush.msra.mxu0 0.0
    %407 = vmatpush.msra.mxu0 0.0
    %408 = vmatpush.msra.mxu0 0.0
    %409 = vmatpush.msra.mxu0 0.0
    %410 = vmatpush.msra.mxu0 0.0
    %411 = vmatpush.msra.mxu0 0.0
    %v412 = vand.u32 %v17, 4294901760
    %413 = vmatpush.msra.mxu0 %v412
    %v414 = vand.u32 %v20, 4294901760
    %v415 = vsub.f32 %v20, %v414
    %v416 = vand.u32 %v415, 4294901760
    %417 = vmatmul.f32.gmra.mxu0 %v416
    %v418 = vpop.f32.mrf.mxu0
    %v419 = vadd.f32 %v380, %v418
    %v420 = vand.u32 %v23, 4294901760
    %v421 = vsub.f32 %v23, %v420
    %v422 = vand.u32 %v421, 4294901760
    %423 = vmatmul.f32.gmra.mxu0 %v422
    %v424 = vpop.f32.mrf.mxu0
    %v425 = vadd.f32 %v385, %v424
    %v426 = vand.u32 %v26, 4294901760
    %v427 = vsub.f32 %v26, %v426
    %v428 = vand.u32 %v427, 4294901760
    %429 = vmatmul.f32.gmra.mxu0 %v428
    %v430 = vpop.f32.mrf.mxu0
    %v431 = vadd.f32 %v390, %v430
    %v432 = vand.u32 %v29, 4294901760
    %v433 = vsub.f32 %v29, %v432
    %v434 = vand.u32 %v433, 4294901760
    %435 = vmatmul.f32.gmra.mxu0 %v434
    %v436 = vpop.f32.mrf.mxu0
    %v437 = vadd.f32 %v395, %v436
    %438 = vdwg.mxu0
    %439 = vmatpush.msra.mxu0 0.0
    %440 = vmatpush.msra.mxu0 0.0
    %441 = vmatpush.msra.mxu0 0.0
    %442 = vmatpush.msra.mxu0 0.0
    %443 = vmatpush.msra.mxu0 0.0
    %444 = vmatpush.msra.mxu0 0.0
    %445 = vmatpush.msra.mxu0 0.0
    %446 = vmatpush.msra.mxu0 0.0
    %447 = vmatpush.msra.mxu0 0.0
    %448 = vmatpush.msra.mxu0 0.0
    %449 = vmatpush.msra.mxu0 0.0
    %450 = vmatpush.msra.mxu0 0.0
    %451 = vmatpush.msra.mxu0 0.0
    %452 = vmatpush.msra.mxu0 0.0
    %453 = vmatpush.msra.mxu0 0.0
    %v454 = vand.u32 %v17, 4294901760
    %v455 = vsub.f32 %v17, %v454
    %v456 = vand.u32 %v455, 4294901760
    %457 = vmatpush.msra.mxu0 %v456
    %v458 = vand.u32 %v20, 4294901760
    %459 = vmatmul.f32.gmra.mxu0 %v458
    %v460 = vpop.f32.mrf.mxu0
    %v461 = vadd.f32 %v419, %v460
    %v462 = vand.u32 %v23, 4294901760
    %463 = vmatmul.f32.gmra.mxu0 %v462
    %v464 = vpop.f32.mrf.mxu0
    %v465 = vadd.f32 %v425, %v464
    %v466 = vand.u32 %v26, 4294901760
    %467 = vmatmul.f32.gmra.mxu0 %v466
    %v468 = vpop.f32.mrf.mxu0
    %v469 = vadd.f32 %v431, %v468
    %v470 = vand.u32 %v29, 4294901760
    %471 = vmatmul.f32.gmra.mxu0 %v470
    %v472 = vpop.f32.mrf.mxu0
    %v473 = vadd.f32 %v437, %v472
    %474 = vdwg.mxu0
    %475 = vmatpush.msra.mxu0 0.0
    %476 = vmatpush.msra.mxu0 0.0
    %477 = vmatpush.msra.mxu0 0.0
    %478 = vmatpush.msra.mxu0 0.0
    %479 = vmatpush.msra.mxu0 0.0
    %480 = vmatpush.msra.mxu0 0.0
    %481 = vmatpush.msra.mxu0 0.0
    %482 = vmatpush.msra.mxu0 0.0
    %483 = vmatpush.msra.mxu0 0.0
    %484 = vmatpush.msra.mxu0 0.0
    %485 = vmatpush.msra.mxu0 0.0
    %486 = vmatpush.msra.mxu0 0.0
    %487 = vmatpush.msra.mxu0 0.0
    %488 = vmatpush.msra.mxu0 0.0
    %489 = vmatpush.msra.mxu0 0.0
    %v490 = vand.u32 %v17, 4294901760
    %491 = vmatpush.msra.mxu0 %v490
    %v492 = vand.u32 %v20, 4294901760
    %493 = vmatmul.f32.gmra.mxu0 %v492
    %v494 = vpop.f32.mrf.mxu0
    %v495 = vadd.f32 %v461, %v494
    %v496 = vand.u32 %v23, 4294901760
    %497 = vmatmul.f32.gmra.mxu0 %v496
    %v498 = vpop.f32.mrf.mxu0
    %v499 = vadd.f32 %v465, %v498
    %v500 = vand.u32 %v26, 4294901760
    %501 = vmatmul.f32.gmra.mxu0 %v500
    %v502 = vpop.f32.mrf.mxu0
    %v503 = vadd.f32 %v469, %v502
    %v504 = vand.u32 %v29, 4294901760
    %505 = vmatmul.f32.gmra.mxu0 %v504
    %v506 = vpop.f32.mrf.mxu0
    %v507 = vadd.f32 %v473, %v506
    %508 = vdwg.mxu0
    %v509 = vand.u32 2147483647, %v256
    %vm510 = vcmp.le.f32.partialorder %v509, 0.7853982
    %vm511 = vcmp.lt.s32.totalorder %v256, 0
    %v512 = vand.u32 %v256, 2139095040
    %v513 = vshrl.u32 %v512, 23
    %v514 = vsub.s32 %v513, 127
    %v515 = vand.u32 2147483647, %v256
    %v516 = vand.u32 %v515, 8388607
    %v517 = vor.u32 %v516, 8388608
    %v518 = vsub.s32 0, %v517
    %v519 = vadd.s32 %v514, 1
    %vm520 = vcmp.gt.s32.totalorder %v519, 0
    %v521 = vsel %vm520, %v519, 0
    %v522 = vshrl.u32 %v521, 5
    %v523 = vand.u32 %v521, 31
    %v524 = vsub.s32 32, %v523
    %v525 = vshrl.u32 683565275, %v524
    %v526 = vshll.u32 683565275, %v523
    %v527 = vshrl.u32 2475754826, %v524
    %v528 = vor.u32 %v526, %v527
    %v529 = vshll.u32 2475754826, %v523
    %v530 = vshrl.u32 2131351028, %v524
    %v531 = vor.u32 %v529, %v530
    %v532 = vshll.u32 2131351028, %v523
    %v533 = vshrl.u32 2102212464, %v524
    %v534 = vor.u32 %v532, %v533
    %v535 = vshll.u32 2102212464, %v523
    %v536 = vshrl.u32 920167782, %v524
    %v537 = vor.u32 %v535, %v536
    %v538 = vshll.u32 920167782, %v523
    %v539 = vshrl.u32 1326507024, %v524
    %v540 = vor.u32 %v538, %v539
    %vm541 = vcmp.lt.s32.totalorder %v522, 1
    %vm542 = vcmp.lt.s32.totalorder %v522, 2
    %vm543 = vcmp.lt.s32.totalorder %v522, 3
    %vm544 = vcmp.lt.s32.totalorder %v522, 4
    %v545 = vsel %vm541, %v525, %v528
    %v546 = vsel %vm544, %v534, 2102212464
    %v547 = vsel %vm543, %v531, %v546
    %v548 = vsel %vm542, %v545, %v547
    %v549 = vsel %vm541, %v528, %v531
    %v550 = vsel %vm544, %v537, 920167782
    %v551 = vsel %vm543, %v534, %v550
    %v552 = vsel %vm542, %v549, %v551
    %v553 = vsel %vm541, %v531, %v534
    %v554 = vsel %vm544, %v540, 1326507024
    %v555 = vsel %vm543, %v537, %v554
    %v556 = vsel %vm542, %v553, %v555
    %v557 = vshll.u32 %v517, 8
    %v558 = vand.u32 %v557, 65535
    %v559 = vshrl.u32 %v557, 16
    %v560 = vand.u32 %v556, 65535
    %v561 = vshrl.u32 %v556, 16
    %v562 = vmul.u32 %v558, %v560
    %v563 = vmul.u32 %v558, %v561
    %v564 = vmul.u32 %v559, %v560
    %v565 = vmul.u32 %v559, %v561
    %v566 = vshll.u32 %v563, 16
    %v567 = vshrl.u32 %v563, 16
    %v568 = vshll.u32 %v564, 16
    %v569 = vshrl.u32 %v564, 16
    %vm570 = vc.u32 %v562, %v566
    %v571 = vsel %vm570, 1, 0
    %v572 = vadd.s32 %v562, %v566
    %v573 = vadd.s32 %v565, %v571
    %vm574 = vc.u32 %v572, %v568
    %v575 = vsel %vm574, 1, 0
    %v576 = vadd.s32 %v572, %v568
    %v577 = vadd.s32 %v573, %v575
    %v578 = vadd.s32 %v577, %v567
    %v579 = vadd.s32 %v578, %v569
    %v580 = vand.u32 %v557, 65535
    %v581 = vshrl.u32 %v557, 16
    %v582 = vand.u32 %v552, 65535
    %v583 = vshrl.u32 %v552, 16
    %v584 = vmul.u32 %v580, %v582
    %v585 = vmul.u32 %v580, %v583
    %v586 = vmul.u32 %v581, %v582
    %v587 = vmul.u32 %v581, %v583
    %v588 = vshll.u32 %v585, 16
    %v589 = vshrl.u32 %v585, 16
    %v590 = vshll.u32 %v586, 16
    %v591 = vshrl.u32 %v586, 16
    %vm592 = vc.u32 %v584, %v588
    %v593 = vsel %vm592, 1, 0
    %v594 = vadd.s32 %v584, %v588
    %v595 = vadd.s32 %v587, %v593
    %vm596 = vc.u32 %v594, %v590
    %v597 = vsel %vm596, 1, 0
    %v598 = vadd.s32 %v594, %v590
    %v599 = vadd.s32 %v595, %v597
    %v600 = vadd.s32 %v599, %v589
    %v601 = vadd.s32 %v600, %v591
    %v602 = vmul.u32 %v557, %v548
    %v603 = vadd.s32 %v579, %v598
    %vm604 = vc.u32 %v579, %v598
    %v605 = vadd.s32 %v601, 1
    %v606 = vsel %vm604, %v605, %v601
    %v607 = vadd.s32 %v602, %v606
    %v608 = vadd.s32 %v607, 536870912
    %v609 = vshrl.u32 %v608, 30
    %v610 = vshll.u32 %v609, 30
    %v611 = vsub.s32 %v607, %v610
    %vm612 = vcmp.lt.s32.totalorder %v611, 0
    %v613 = vsub.s32 0, %v611
    %v614 = vsel %vm612, %v613, %v611
    %v615 = vclz %v614
    %v616 = vsub.s32 %v615, 2
    %vm617 = vcmp.gt.s32.totalorder 0, %v616
    %v618 = vsel %vm617, 0, %v616
    %v619 = vsub.s32 32, %v618
    %v620 = vshll.u32 %v611, %v618
    %v621 = vshrl.u32 %v603, %v619
    %v622 = vor.u32 %v620, %v621
    %v623 = vsub.s32 4294967266, %v618
    %v624 = vadd.s32 %v623, 127
    %v625 = vshll.u32 %v624, 23
    %v626 = vor.u32 4788187, %v625
    %v627 = vand.u32 2147483647, %v626
    %v629 = vcvt.s32.f32 %v622
    %v630 = vmul.f32 %v629, %v627
    %v631 = vxor.u32 %v630, 2147483648
    %v632 = vsel %vm511, %v631, %v630
    %v633 = vsub.s32 4, %v609
    %v634 = vsel %vm511, %v633, %v609
    %v635 = vsel %vm510, %v256, %v632
    %v636 = vsel %vm510, 0, %v634
    %v637 = vmul.f32 %v635, %v635
    %v638 = vmul.f32 %v637, -0.001358992
    %v639 = vadd.f32 %v638, 0.041655596
    %v640 = vmul.f32 %v637, %v639
    %v641 = vadd.f32 %v640, -0.4999988
    %v642 = vmul.f32 %v637, %v641
    %v643 = vadd.f32 1.0, %v642
    %v644 = vmul.f32 %v635, %v635
    %v645 = vmul.f32 %v644, -0.00019511016
    %v646 = vadd.f32 %v645, 0.008332121
    %v647 = vmul.f32 %v644, %v646
    %v648 = vadd.f32 %v647, -0.16666654
    %v649 = vmul.f32 %v644, %v648
    %v650 = vadd.f32 %v649, 1.0
    %v651 = vmul.f32 %v650, %v635
    %vm652 = vweird.f32 %v256
    %v653 = vadd.s32 %v636, 3
    %v654 = vand.u32 %v653, 3
    %vm655 = vcmp.lt.s32.totalorder %v654, 2
    %vm656 = vcmp.eq.s32.totalorder %v654, 0
    %v657 = vxor.u32 %v651, 2147483648
    %v658 = vsel %vm656, %v643, %v657
    %vm659 = vcmp.eq.s32.totalorder %v654, 2
    %v660 = vxor.u32 %v643, 2147483648
    %v661 = vsel %vm659, %v660, %v651
    %v662 = vsel %vm655, %v658, %v661
    %v663 = vsel %vm652, nan, %v662
    %v664 = vand.u32 2147483647, %v495
    %vm665 = vcmp.le.f32.partialorder %v664, 0.7853982
    %vm666 = vcmp.lt.s32.totalorder %v495, 0
    %v667 = vand.u32 %v495, 2139095040
    %v668 = vshrl.u32 %v667, 23
    %v669 = vsub.s32 %v668, 127
    %v670 = vand.u32 2147483647, %v495
    %v671 = vand.u32 %v670, 8388607
    %v672 = vor.u32 %v671, 8388608
    %v673 = vsub.s32 0, %v672
    %v674 = vadd.s32 %v669, 1
    %vm675 = vcmp.gt.s32.totalorder %v674, 0
    %v676 = vsel %vm675, %v674, 0
    %v677 = vshrl.u32 %v676, 5
    %v678 = vand.u32 %v676, 31
    %v679 = vsub.s32 32, %v678
    %v680 = vshrl.u32 683565275, %v679
    %v681 = vshll.u32 683565275, %v678
    %v682 = vshrl.u32 2475754826, %v679
    %v683 = vor.u32 %v681, %v682
    %v684 = vshll.u32 2475754826, %v678
    %v685 = vshrl.u32 2131351028, %v679
    %v686 = vor.u32 %v684, %v685
    %v687 = vshll.u32 2131351028, %v678
    %v688 = vshrl.u32 2102212464, %v679
    %v689 = vor.u32 %v687, %v688
    %v690 = vshll.u32 2102212464, %v678
    %v691 = vshrl.u32 920167782, %v679
    %v692 = vor.u32 %v690, %v691
    %v693 = vshll.u32 920167782, %v678
    %v694 = vshrl.u32 1326507024, %v679
    %v695 = vor.u32 %v693, %v694
    %vm696 = vcmp.lt.s32.totalorder %v677, 1
    %vm697 = vcmp.lt.s32.totalorder %v677, 2
    %vm698 = vcmp.lt.s32.totalorder %v677, 3
    %vm699 = vcmp.lt.s32.totalorder %v677, 4
    %v700 = vsel %vm696, %v680, %v683
    %v701 = vsel %vm699, %v689, 2102212464
    %v702 = vsel %vm698, %v686, %v701
    %v703 = vsel %vm697, %v700, %v702
    %v704 = vsel %vm696, %v683, %v686
    %v705 = vsel %vm699, %v692, 920167782
    %v706 = vsel %vm698, %v689, %v705
    %v707 = vsel %vm697, %v704, %v706
    %v708 = vsel %vm696, %v686, %v689
    %v709 = vsel %vm699, %v695, 1326507024
    %v710 = vsel %vm698, %v692, %v709
    %v711 = vsel %vm697, %v708, %v710
    %v712 = vshll.u32 %v672, 8
    %v713 = vand.u32 %v712, 65535
    %v714 = vshrl.u32 %v712, 16
    %v715 = vand.u32 %v711, 65535
    %v716 = vshrl.u32 %v711, 16
    %v717 = vmul.u32 %v713, %v715
    %v718 = vmul.u32 %v713, %v716
    %v719 = vmul.u32 %v714, %v715
    %v720 = vmul.u32 %v714, %v716
    %v721 = vshll.u32 %v718, 16
    %v722 = vshrl.u32 %v718, 16
    %v723 = vshll.u32 %v719, 16
    %v724 = vshrl.u32 %v719, 16
    %vm725 = vc.u32 %v717, %v721
    %v726 = vsel %vm725, 1, 0
    %v727 = vadd.s32 %v717, %v721
    %v728 = vadd.s32 %v720, %v726
    %vm729 = vc.u32 %v727, %v723
    %v730 = vsel %vm729, 1, 0
    %v731 = vadd.s32 %v727, %v723
    %v732 = vadd.s32 %v728, %v730
    %v733 = vadd.s32 %v732, %v722
    %v734 = vadd.s32 %v733, %v724
    %v735 = vand.u32 %v712, 65535
    %v736 = vshrl.u32 %v712, 16
    %v737 = vand.u32 %v707, 65535
    %v738 = vshrl.u32 %v707, 16
    %v739 = vmul.u32 %v735, %v737
    %v740 = vmul.u32 %v735, %v738
    %v741 = vmul.u32 %v736, %v737
    %v742 = vmul.u32 %v736, %v738
    %v743 = vshll.u32 %v740, 16
    %v744 = vshrl.u32 %v740, 16
    %v745 = vshll.u32 %v741, 16
    %v746 = vshrl.u32 %v741, 16
    %vm747 = vc.u32 %v739, %v743
    %v748 = vsel %vm747, 1, 0
    %v749 = vadd.s32 %v739, %v743
    %v750 = vadd.s32 %v742, %v748
    %vm751 = vc.u32 %v749, %v745
    %v752 = vsel %vm751, 1, 0
    %v753 = vadd.s32 %v749, %v745
    %v754 = vadd.s32 %v750, %v752
    %v755 = vadd.s32 %v754, %v744
    %v756 = vadd.s32 %v755, %v746
    %v757 = vmul.u32 %v712, %v703
    %v758 = vadd.s32 %v734, %v753
    %vm759 = vc.u32 %v734, %v753
    %v760 = vadd.s32 %v756, 1
    %v761 = vsel %vm759, %v760, %v756
    %v762 = vadd.s32 %v757, %v761
    %v763 = vadd.s32 %v762, 536870912
    %v764 = vshrl.u32 %v763, 30
    %v765 = vshll.u32 %v764, 30
    %v766 = vsub.s32 %v762, %v765
    %vm767 = vcmp.lt.s32.totalorder %v766, 0
    %v768 = vsub.s32 0, %v766
    %v769 = vsel %vm767, %v768, %v766
    %v770 = vclz %v769
    %v771 = vsub.s32 %v770, 2
    %vm772 = vcmp.gt.s32.totalorder 0, %v771
    %v773 = vsel %vm772, 0, %v771
    %v774 = vsub.s32 32, %v773
    %v775 = vshll.u32 %v766, %v773
    %v776 = vshrl.u32 %v758, %v774
    %v777 = vor.u32 %v775, %v776
    %v778 = vsub.s32 4294967266, %v773
    %v779 = vadd.s32 %v778, 127
    %v780 = vshll.u32 %v779, 23
    %v781 = vor.u32 4788187, %v780
    %v782 = vand.u32 2147483647, %v781
    %v784 = vcvt.s32.f32 %v777
    %v785 = vmul.f32 %v784, %v782
    %v786 = vxor.u32 %v785, 2147483648
    %v787 = vsel %vm666, %v786, %v785
    %v788 = vsub.s32 4, %v764
    %v789 = vsel %vm666, %v788, %v764
    %v790 = vsel %vm665, %v495, %v787
    %v791 = vsel %vm665, 0, %v789
    %v792 = vmul.f32 %v790, %v790
    %v793 = vmul.f32 %v792, -0.001358992
    %v794 = vadd.f32 %v793, 0.041655596
    %v795 = vmul.f32 %v792, %v794
    %v796 = vadd.f32 %v795, -0.4999988
    %v797 = vmul.f32 %v792, %v796
    %v798 = vadd.f32 1.0, %v797
    %v799 = vmul.f32 %v790, %v790
    %v800 = vmul.f32 %v799, -0.00019511016
    %v801 = vadd.f32 %v800, 0.008332121
    %v802 = vmul.f32 %v799, %v801
    %v803 = vadd.f32 %v802, -0.16666654
    %v804 = vmul.f32 %v799, %v803
    %v805 = vadd.f32 %v804, 1.0
    %v806 = vmul.f32 %v805, %v790
    %vm807 = vweird.f32 %v495
    %v808 = vadd.s32 %v791, 3
    %v809 = vand.u32 %v808, 3
    %vm810 = vcmp.lt.s32.totalorder %v809, 2
    %vm811 = vcmp.eq.s32.totalorder %v809, 0
    %v812 = vxor.u32 %v806, 2147483648
    %v813 = vsel %vm811, %v798, %v812
    %vm814 = vcmp.eq.s32.totalorder %v809, 2
    %v815 = vxor.u32 %v798, 2147483648
    %v816 = vsel %vm814, %v815, %v806
    %v817 = vsel %vm810, %v813, %v816
    %v818 = vsel %vm807, nan, %v817
    %v819 = vand.u32 2147483647, %v260
    %vm820 = vcmp.le.f32.partialorder %v819, 0.7853982
    %vm821 = vcmp.lt.s32.totalorder %v260, 0
    %v822 = vand.u32 %v260, 2139095040
    %v823 = vshrl.u32 %v822, 23
    %v824 = vsub.s32 %v823, 127
    %v825 = vand.u32 2147483647, %v260
    %v826 = vand.u32 %v825, 8388607
    %v827 = vor.u32 %v826, 8388608
    %v828 = vsub.s32 0, %v827
    %v829 = vadd.s32 %v824, 1
    %vm830 = vcmp.gt.s32.totalorder %v829, 0
    %v831 = vsel %vm830, %v829, 0
    %v832 = vshrl.u32 %v831, 5
    %v833 = vand.u32 %v831, 31
    %v834 = vsub.s32 32, %v833
    %v835 = vshrl.u32 683565275, %v834
    %v836 = vshll.u32 683565275, %v833
    %v837 = vshrl.u32 2475754826, %v834
    %v838 = vor.u32 %v836, %v837
    %v839 = vshll.u32 2475754826, %v833
    %v840 = vshrl.u32 2131351028, %v834
    %v841 = vor.u32 %v839, %v840
    %v842 = vshll.u32 2131351028, %v833
    %v843 = vshrl.u32 2102212464, %v834
    %v844 = vor.u32 %v842, %v843
    %v845 = vshll.u32 2102212464, %v833
    %v846 = vshrl.u32 920167782, %v834
    %v847 = vor.u32 %v845, %v846
    %v848 = vshll.u32 920167782, %v833
    %v849 = vshrl.u32 1326507024, %v834
    %v850 = vor.u32 %v848, %v849
    %vm851 = vcmp.lt.s32.totalorder %v832, 1
    %vm852 = vcmp.lt.s32.totalorder %v832, 2
    %vm853 = vcmp.lt.s32.totalorder %v832, 3
    %vm854 = vcmp.lt.s32.totalorder %v832, 4
    %v855 = vsel %vm851, %v835, %v838
    %v856 = vsel %vm854, %v844, 2102212464
    %v857 = vsel %vm853, %v841, %v856
    %v858 = vsel %vm852, %v855, %v857
    %v859 = vsel %vm851, %v838, %v841
    %v860 = vsel %vm854, %v847, 920167782
    %v861 = vsel %vm853, %v844, %v860
    %v862 = vsel %vm852, %v859, %v861
    %v863 = vsel %vm851, %v841, %v844
    %v864 = vsel %vm854, %v850, 1326507024
    %v865 = vsel %vm853, %v847, %v864
    %v866 = vsel %vm852, %v863, %v865
    %v867 = vshll.u32 %v827, 8
    %v868 = vand.u32 %v867, 65535
    %v869 = vshrl.u32 %v867, 16
    %v870 = vand.u32 %v866, 65535
    %v871 = vshrl.u32 %v866, 16
    %v872 = vmul.u32 %v868, %v870
    %v873 = vmul.u32 %v868, %v871
    %v874 = vmul.u32 %v869, %v870
    %v875 = vmul.u32 %v869, %v871
    %v876 = vshll.u32 %v873, 16
    %v877 = vshrl.u32 %v873, 16
    %v878 = vshll.u32 %v874, 16
    %v879 = vshrl.u32 %v874, 16
    %vm880 = vc.u32 %v872, %v876
    %v881 = vsel %vm880, 1, 0
    %v882 = vadd.s32 %v872, %v876
    %v883 = vadd.s32 %v875, %v881
    %vm884 = vc.u32 %v882, %v878
    %v885 = vsel %vm884, 1, 0
    %v886 = vadd.s32 %v882, %v878
    %v887 = vadd.s32 %v883, %v885
    %v888 = vadd.s32 %v887, %v877
    %v889 = vadd.s32 %v888, %v879
    %v890 = vand.u32 %v867, 65535
    %v891 = vshrl.u32 %v867, 16
    %v892 = vand.u32 %v862, 65535
    %v893 = vshrl.u32 %v862, 16
    %v894 = vmul.u32 %v890, %v892
    %v895 = vmul.u32 %v890, %v893
    %v896 = vmul.u32 %v891, %v892
    %v897 = vmul.u32 %v891, %v893
    %v898 = vshll.u32 %v895, 16
    %v899 = vshrl.u32 %v895, 16
    %v900 = vshll.u32 %v896, 16
    %v901 = vshrl.u32 %v896, 16
    %vm902 = vc.u32 %v894, %v898
    %v903 = vsel %vm902, 1, 0
    %v904 = vadd.s32 %v894, %v898
    %v905 = vadd.s32 %v897, %v903
    %vm906 = vc.u32 %v904, %v900
    %v907 = vsel %vm906, 1, 0
    %v908 = vadd.s32 %v904, %v900
    %v909 = vadd.s32 %v905, %v907
    %v910 = vadd.s32 %v909, %v899
    %v911 = vadd.s32 %v910, %v901
    %v912 = vmul.u32 %v867, %v858
    %v913 = vadd.s32 %v889, %v908
    %vm914 = vc.u32 %v889, %v908
    %v915 = vadd.s32 %v911, 1
    %v916 = vsel %vm914, %v915, %v911
    %v917 = vadd.s32 %v912, %v916
    %v918 = vadd.s32 %v917, 536870912
    %v919 = vshrl.u32 %v918, 30
    %v920 = vshll.u32 %v919, 30
    %v921 = vsub.s32 %v917, %v920
    %vm922 = vcmp.lt.s32.totalorder %v921, 0
    %v923 = vsub.s32 0, %v921
    %v924 = vsel %vm922, %v923, %v921
    %v925 = vclz %v924
    %v926 = vsub.s32 %v925, 2
    %vm927 = vcmp.gt.s32.totalorder 0, %v926
    %v928 = vsel %vm927, 0, %v926
    %v929 = vsub.s32 32, %v928
    %v930 = vshll.u32 %v921, %v928
    %v931 = vshrl.u32 %v913, %v929
    %v932 = vor.u32 %v930, %v931
    %v933 = vsub.s32 4294967266, %v928
    %v934 = vadd.s32 %v933, 127
    %v935 = vshll.u32 %v934, 23
    %v936 = vor.u32 4788187, %v935
    %v937 = vand.u32 2147483647, %v936
    %v939 = vcvt.s32.f32 %v932
    %v940 = vmul.f32 %v939, %v937
    %v941 = vxor.u32 %v940, 2147483648
    %v942 = vsel %vm821, %v941, %v940
    %v943 = vsub.s32 4, %v919
    %v944 = vsel %vm821, %v943, %v919
    %v945 = vsel %vm820, %v260, %v942
    %v946 = vsel %vm820, 0, %v944
    %v947 = vmul.f32 %v945, %v945
    %v948 = vmul.f32 %v947, -0.001358992
    %v949 = vadd.f32 %v948, 0.041655596
    %v950 = vmul.f32 %v947, %v949
    %v951 = vadd.f32 %v950, -0.4999988
    %v952 = vmul.f32 %v947, %v951
    %v953 = vadd.f32 1.0, %v952
    %v954 = vmul.f32 %v945, %v945
    %v955 = vmul.f32 %v954, -0.00019511016
    %v956 = vadd.f32 %v955, 0.008332121
    %v957 = vmul.f32 %v954, %v956
    %v958 = vadd.f32 %v957, -0.16666654
    %v959 = vmul.f32 %v954, %v958
    %v960 = vadd.f32 %v959, 1.0
    %v961 = vmul.f32 %v960, %v945
    %vm962 = vweird.f32 %v260
    %v963 = vadd.s32 %v946, 3
    %v964 = vand.u32 %v963, 3
    %vm965 = vcmp.lt.s32.totalorder %v964, 2
    %vm966 = vcmp.eq.s32.totalorder %v964, 0
    %v967 = vxor.u32 %v961, 2147483648
    %v968 = vsel %vm966, %v953, %v967
    %vm969 = vcmp.eq.s32.totalorder %v964, 2
    %v970 = vxor.u32 %v953, 2147483648
    %v971 = vsel %vm969, %v970, %v961
    %v972 = vsel %vm965, %v968, %v971
    %v973 = vsel %vm962, nan, %v972
    %v974 = vand.u32 2147483647, %v499
    %vm975 = vcmp.le.f32.partialorder %v974, 0.7853982
    %vm976 = vcmp.lt.s32.totalorder %v499, 0
    %v977 = vand.u32 %v499, 2139095040
    %v978 = vshrl.u32 %v977, 23
    %v979 = vsub.s32 %v978, 127
    %v980 = vand.u32 2147483647, %v499
    %v981 = vand.u32 %v980, 8388607
    %v982 = vor.u32 %v981, 8388608
    %v983 = vsub.s32 0, %v982
    %v984 = vadd.s32 %v979, 1
    %vm985 = vcmp.gt.s32.totalorder %v984, 0
    %v986 = vsel %vm985, %v984, 0
    %v987 = vshrl.u32 %v986, 5
    %v988 = vand.u32 %v986, 31
    %v989 = vsub.s32 32, %v988
    %v990 = vshrl.u32 683565275, %v989
    %v991 = vshll.u32 683565275, %v988
    %v992 = vshrl.u32 2475754826, %v989
    %v993 = vor.u32 %v991, %v992
    %v994 = vshll.u32 2475754826, %v988
    %v995 = vshrl.u32 2131351028, %v989
    %v996 = vor.u32 %v994, %v995
    %v997 = vshll.u32 2131351028, %v988
    %v998 = vshrl.u32 2102212464, %v989
    %v999 = vor.u32 %v997, %v998
    %v1000 = vshll.u32 2102212464, %v988
    %v1001 = vshrl.u32 920167782, %v989
    %v1002 = vor.u32 %v1000, %v1001
    %v1003 = vshll.u32 920167782, %v988
    %v1004 = vshrl.u32 1326507024, %v989
    %v1005 = vor.u32 %v1003, %v1004
    %vm1006 = vcmp.lt.s32.totalorder %v987, 1
    %vm1007 = vcmp.lt.s32.totalorder %v987, 2
    %vm1008 = vcmp.lt.s32.totalorder %v987, 3
    %vm1009 = vcmp.lt.s32.totalorder %v987, 4
    %v1010 = vsel %vm1006, %v990, %v993
    %v1011 = vsel %vm1009, %v999, 2102212464
    %v1012 = vsel %vm1008, %v996, %v1011
    %v1013 = vsel %vm1007, %v1010, %v1012
    %v1014 = vsel %vm1006, %v993, %v996
    %v1015 = vsel %vm1009, %v1002, 920167782
    %v1016 = vsel %vm1008, %v999, %v1015
    %v1017 = vsel %vm1007, %v1014, %v1016
    %v1018 = vsel %vm1006, %v996, %v999
    %v1019 = vsel %vm1009, %v1005, 1326507024
    %v1020 = vsel %vm1008, %v1002, %v1019
    %v1021 = vsel %vm1007, %v1018, %v1020
    %v1022 = vshll.u32 %v982, 8
    %v1023 = vand.u32 %v1022, 65535
    %v1024 = vshrl.u32 %v1022, 16
    %v1025 = vand.u32 %v1021, 65535
    %v1026 = vshrl.u32 %v1021, 16
    %v1027 = vmul.u32 %v1023, %v1025
    %v1028 = vmul.u32 %v1023, %v1026
    %v1029 = vmul.u32 %v1024, %v1025
    %v1030 = vmul.u32 %v1024, %v1026
    %v1031 = vshll.u32 %v1028, 16
    %v1032 = vshrl.u32 %v1028, 16
    %v1033 = vshll.u32 %v1029, 16
    %v1034 = vshrl.u32 %v1029, 16
    %vm1035 = vc.u32 %v1027, %v1031
    %v1036 = vsel %vm1035, 1, 0
    %v1037 = vadd.s32 %v1027, %v1031
    %v1038 = vadd.s32 %v1030, %v1036
    %vm1039 = vc.u32 %v1037, %v1033
    %v1040 = vsel %vm1039, 1, 0
    %v1041 = vadd.s32 %v1037, %v1033
    %v1042 = vadd.s32 %v1038, %v1040
    %v1043 = vadd.s32 %v1042, %v1032
    %v1044 = vadd.s32 %v1043, %v1034
    %v1045 = vand.u32 %v1022, 65535
    %v1046 = vshrl.u32 %v1022, 16
    %v1047 = vand.u32 %v1017, 65535
    %v1048 = vshrl.u32 %v1017, 16
    %v1049 = vmul.u32 %v1045, %v1047
    %v1050 = vmul.u32 %v1045, %v1048
    %v1051 = vmul.u32 %v1046, %v1047
    %v1052 = vmul.u32 %v1046, %v1048
    %v1053 = vshll.u32 %v1050, 16
    %v1054 = vshrl.u32 %v1050, 16
    %v1055 = vshll.u32 %v1051, 16
    %v1056 = vshrl.u32 %v1051, 16
    %vm1057 = vc.u32 %v1049, %v1053
    %v1058 = vsel %vm1057, 1, 0
    %v1059 = vadd.s32 %v1049, %v1053
    %v1060 = vadd.s32 %v1052, %v1058
    %vm1061 = vc.u32 %v1059, %v1055
    %v1062 = vsel %vm1061, 1, 0
    %v1063 = vadd.s32 %v1059, %v1055
    %v1064 = vadd.s32 %v1060, %v1062
    %v1065 = vadd.s32 %v1064, %v1054
    %v1066 = vadd.s32 %v1065, %v1056
    %v1067 = vmul.u32 %v1022, %v1013
    %v1068 = vadd.s32 %v1044, %v1063
    %vm1069 = vc.u32 %v1044, %v1063
    %v1070 = vadd.s32 %v1066, 1
    %v1071 = vsel %vm1069, %v1070, %v1066
    %v1072 = vadd.s32 %v1067, %v1071
    %v1073 = vadd.s32 %v1072, 536870912
    %v1074 = vshrl.u32 %v1073, 30
    %v1075 = vshll.u32 %v1074, 30
    %v1076 = vsub.s32 %v1072, %v1075
    %vm1077 = vcmp.lt.s32.totalorder %v1076, 0
    %v1078 = vsub.s32 0, %v1076
    %v1079 = vsel %vm1077, %v1078, %v1076
    %v1080 = vclz %v1079
    %v1081 = vsub.s32 %v1080, 2
    %vm1082 = vcmp.gt.s32.totalorder 0, %v1081
    %v1083 = vsel %vm1082, 0, %v1081
    %v1084 = vsub.s32 32, %v1083
    %v1085 = vshll.u32 %v1076, %v1083
    %v1086 = vshrl.u32 %v1068, %v1084
    %v1087 = vor.u32 %v1085, %v1086
    %v1088 = vsub.s32 4294967266, %v1083
    %v1089 = vadd.s32 %v1088, 127
    %v1090 = vshll.u32 %v1089, 23
    %v1091 = vor.u32 4788187, %v1090
    %v1092 = vand.u32 2147483647, %v1091
    %v1094 = vcvt.s32.f32 %v1087
    %v1095 = vmul.f32 %v1094, %v1092
    %v1096 = vxor.u32 %v1095, 2147483648
    %v1097 = vsel %vm976, %v1096, %v1095
    %v1098 = vsub.s32 4, %v1074
    %v1099 = vsel %vm976, %v1098, %v1074
    %v1100 = vsel %vm975, %v499, %v1097
    %v1101 = vsel %vm975, 0, %v1099
    %v1102 = vmul.f32 %v1100, %v1100
    %v1103 = vmul.f32 %v1102, -0.001358992
    %v1104 = vadd.f32 %v1103, 0.041655596
    %v1105 = vmul.f32 %v1102, %v1104
    %v1106 = vadd.f32 %v1105, -0.4999988
    %v1107 = vmul.f32 %v1102, %v1106
    %v1108 = vadd.f32 1.0, %v1107
    %v1109 = vmul.f32 %v1100, %v1100
    %v1110 = vmul.f32 %v1109, -0.00019511016
    %v1111 = vadd.f32 %v1110, 0.008332121
    %v1112 = vmul.f32 %v1109, %v1111
    %v1113 = vadd.f32 %v1112, -0.16666654
    %v1114 = vmul.f32 %v1109, %v1113
    %v1115 = vadd.f32 %v1114, 1.0
    %v1116 = vmul.f32 %v1115, %v1100
    %vm1117 = vweird.f32 %v499
    %v1118 = vadd.s32 %v1101, 3
    %v1119 = vand.u32 %v1118, 3
    %vm1120 = vcmp.lt.s32.totalorder %v1119, 2
    %vm1121 = vcmp.eq.s32.totalorder %v1119, 0
    %v1122 = vxor.u32 %v1116, 2147483648
    %v1123 = vsel %vm1121, %v1108, %v1122
    %vm1124 = vcmp.eq.s32.totalorder %v1119, 2
    %v1125 = vxor.u32 %v1108, 2147483648
    %v1126 = vsel %vm1124, %v1125, %v1116
    %v1127 = vsel %vm1120, %v1123, %v1126
    %v1128 = vsel %vm1117, nan, %v1127
    %v1129 = vand.u32 2147483647, %v264
    %vm1130 = vcmp.le.f32.partialorder %v1129, 0.7853982
    %vm1131 = vcmp.lt.s32.totalorder %v264, 0
    %v1132 = vand.u32 %v264, 2139095040
    %v1133 = vshrl.u32 %v1132, 23
    %v1134 = vsub.s32 %v1133, 127
    %v1135 = vand.u32 2147483647, %v264
    %v1136 = vand.u32 %v1135, 8388607
    %v1137 = vor.u32 %v1136, 8388608
    %v1138 = vsub.s32 0, %v1137
    %v1139 = vadd.s32 %v1134, 1
    %vm1140 = vcmp.gt.s32.totalorder %v1139, 0
    %v1141 = vsel %vm1140, %v1139, 0
    %v1142 = vshrl.u32 %v1141, 5
    %v1143 = vand.u32 %v1141, 31
    %v1144 = vsub.s32 32, %v1143
    %v1145 = vshrl.u32 683565275, %v1144
    %v1146 = vshll.u32 683565275, %v1143
    %v1147 = vshrl.u32 2475754826, %v1144
    %v1148 = vor.u32 %v1146, %v1147
    %v1149 = vshll.u32 2475754826, %v1143
    %v1150 = vshrl.u32 2131351028, %v1144
    %v1151 = vor.u32 %v1149, %v1150
    %v1152 = vshll.u32 2131351028, %v1143
    %v1153 = vshrl.u32 2102212464, %v1144
    %v1154 = vor.u32 %v1152, %v1153
    %v1155 = vshll.u32 2102212464, %v1143
    %v1156 = vshrl.u32 920167782, %v1144
    %v1157 = vor.u32 %v1155, %v1156
    %v1158 = vshll.u32 920167782, %v1143
    %v1159 = vshrl.u32 1326507024, %v1144
    %v1160 = vor.u32 %v1158, %v1159
    %vm1161 = vcmp.lt.s32.totalorder %v1142, 1
    %vm1162 = vcmp.lt.s32.totalorder %v1142, 2
    %vm1163 = vcmp.lt.s32.totalorder %v1142, 3
    %vm1164 = vcmp.lt.s32.totalorder %v1142, 4
    %v1165 = vsel %vm1161, %v1145, %v1148
    %v1166 = vsel %vm1164, %v1154, 2102212464
    %v1167 = vsel %vm1163, %v1151, %v1166
    %v1168 = vsel %vm1162, %v1165, %v1167
    %v1169 = vsel %vm1161, %v1148, %v1151
    %v1170 = vsel %vm1164, %v1157, 920167782
    %v1171 = vsel %vm1163, %v1154, %v1170
    %v1172 = vsel %vm1162, %v1169, %v1171
    %v1173 = vsel %vm1161, %v1151, %v1154
    %v1174 = vsel %vm1164, %v1160, 1326507024
    %v1175 = vsel %vm1163, %v1157, %v1174
    %v1176 = vsel %vm1162, %v1173, %v1175
    %v1177 = vshll.u32 %v1137, 8
    %v1178 = vand.u32 %v1177, 65535
    %v1179 = vshrl.u32 %v1177, 16
    %v1180 = vand.u32 %v1176, 65535
    %v1181 = vshrl.u32 %v1176, 16
    %v1182 = vmul.u32 %v1178, %v1180
    %v1183 = vmul.u32 %v1178, %v1181
    %v1184 = vmul.u32 %v1179, %v1180
    %v1185 = vmul.u32 %v1179, %v1181
    %v1186 = vshll.u32 %v1183, 16
    %v1187 = vshrl.u32 %v1183, 16
    %v1188 = vshll.u32 %v1184, 16
    %v1189 = vshrl.u32 %v1184, 16
    %vm1190 = vc.u32 %v1182, %v1186
    %v1191 = vsel %vm1190, 1, 0
    %v1192 = vadd.s32 %v1182, %v1186
    %v1193 = vadd.s32 %v1185, %v1191
    %vm1194 = vc.u32 %v1192, %v1188
    %v1195 = vsel %vm1194, 1, 0
    %v1196 = vadd.s32 %v1192, %v1188
    %v1197 = vadd.s32 %v1193, %v1195
    %v1198 = vadd.s32 %v1197, %v1187
    %v1199 = vadd.s32 %v1198, %v1189
    %v1200 = vand.u32 %v1177, 65535
    %v1201 = vshrl.u32 %v1177, 16
    %v1202 = vand.u32 %v1172, 65535
    %v1203 = vshrl.u32 %v1172, 16
    %v1204 = vmul.u32 %v1200, %v1202
    %v1205 = vmul.u32 %v1200, %v1203
    %v1206 = vmul.u32 %v1201, %v1202
    %v1207 = vmul.u32 %v1201, %v1203
    %v1208 = vshll.u32 %v1205, 16
    %v1209 = vshrl.u32 %v1205, 16
    %v1210 = vshll.u32 %v1206, 16
    %v1211 = vshrl.u32 %v1206, 16
    %vm1212 = vc.u32 %v1204, %v1208
    %v1213 = vsel %vm1212, 1, 0
    %v1214 = vadd.s32 %v1204, %v1208
    %v1215 = vadd.s32 %v1207, %v1213
    %vm1216 = vc.u32 %v1214, %v1210
    %v1217 = vsel %vm1216, 1, 0
    %v1218 = vadd.s32 %v1214, %v1210
    %v1219 = vadd.s32 %v1215, %v1217
    %v1220 = vadd.s32 %v1219, %v1209
    %v1221 = vadd.s32 %v1220, %v1211
    %v1222 = vmul.u32 %v1177, %v1168
    %v1223 = vadd.s32 %v1199, %v1218
    %vm1224 = vc.u32 %v1199, %v1218
    %v1225 = vadd.s32 %v1221, 1
    %v1226 = vsel %vm1224, %v1225, %v1221
    %v1227 = vadd.s32 %v1222, %v1226
    %v1228 = vadd.s32 %v1227, 536870912
    %v1229 = vshrl.u32 %v1228, 30
    %v1230 = vshll.u32 %v1229, 30
    %v1231 = vsub.s32 %v1227, %v1230
    %vm1232 = vcmp.lt.s32.totalorder %v1231, 0
    %v1233 = vsub.s32 0, %v1231
    %v1234 = vsel %vm1232, %v1233, %v1231
    %v1235 = vclz %v1234
    %v1236 = vsub.s32 %v1235, 2
    %vm1237 = vcmp.gt.s32.totalorder 0, %v1236
    %v1238 = vsel %vm1237, 0, %v1236
    %v1239 = vsub.s32 32, %v1238
    %v1240 = vshll.u32 %v1231, %v1238
    %v1241 = vshrl.u32 %v1223, %v1239
    %v1242 = vor.u32 %v1240, %v1241
    %v1243 = vsub.s32 4294967266, %v1238
    %v1244 = vadd.s32 %v1243, 127
    %v1245 = vshll.u32 %v1244, 23
    %v1246 = vor.u32 4788187, %v1245
    %v1247 = vand.u32 2147483647, %v1246
    %v1249 = vcvt.s32.f32 %v1242
    %v1250 = vmul.f32 %v1249, %v1247
    %v1251 = vxor.u32 %v1250, 2147483648
    %v1252 = vsel %vm1131, %v1251, %v1250
    %v1253 = vsub.s32 4, %v1229
    %v1254 = vsel %vm1131, %v1253, %v1229
    %v1255 = vsel %vm1130, %v264, %v1252
    %v1256 = vsel %vm1130, 0, %v1254
    %v1257 = vmul.f32 %v1255, %v1255
    %v1258 = vmul.f32 %v1257, -0.001358992
    %v1259 = vadd.f32 %v1258, 0.041655596
    %v1260 = vmul.f32 %v1257, %v1259
    %v1261 = vadd.f32 %v1260, -0.4999988
    %v1262 = vmul.f32 %v1257, %v1261
    %v1263 = vadd.f32 1.0, %v1262
    %v1264 = vmul.f32 %v1255, %v1255
    %v1265 = vmul.f32 %v1264, -0.00019511016
    %v1266 = vadd.f32 %v1265, 0.008332121
    %v1267 = vmul.f32 %v1264, %v1266
    %v1268 = vadd.f32 %v1267, -0.16666654
    %v1269 = vmul.f32 %v1264, %v1268
    %v1270 = vadd.f32 %v1269, 1.0
    %v1271 = vmul.f32 %v1270, %v1255
    %vm1272 = vweird.f32 %v264
    %v1273 = vadd.s32 %v1256, 3
    %v1274 = vand.u32 %v1273, 3
    %vm1275 = vcmp.lt.s32.totalorder %v1274, 2
    %vm1276 = vcmp.eq.s32.totalorder %v1274, 0
    %v1277 = vxor.u32 %v1271, 2147483648
    %v1278 = vsel %vm1276, %v1263, %v1277
    %vm1279 = vcmp.eq.s32.totalorder %v1274, 2
    %v1280 = vxor.u32 %v1263, 2147483648
    %v1281 = vsel %vm1279, %v1280, %v1271
    %v1282 = vsel %vm1275, %v1278, %v1281
    %v1283 = vsel %vm1272, nan, %v1282
    %v1284 = vand.u32 2147483647, %v503
    %vm1285 = vcmp.le.f32.partialorder %v1284, 0.7853982
    %vm1286 = vcmp.lt.s32.totalorder %v503, 0
    %v1287 = vand.u32 %v503, 2139095040
    %v1288 = vshrl.u32 %v1287, 23
    %v1289 = vsub.s32 %v1288, 127
    %v1290 = vand.u32 2147483647, %v503
    %v1291 = vand.u32 %v1290, 8388607
    %v1292 = vor.u32 %v1291, 8388608
    %v1293 = vsub.s32 0, %v1292
    %v1294 = vadd.s32 %v1289, 1
    %vm1295 = vcmp.gt.s32.totalorder %v1294, 0
    %v1296 = vsel %vm1295, %v1294, 0
    %v1297 = vshrl.u32 %v1296, 5
    %v1298 = vand.u32 %v1296, 31
    %v1299 = vsub.s32 32, %v1298
    %v1300 = vshrl.u32 683565275, %v1299
    %v1301 = vshll.u32 683565275, %v1298
    %v1302 = vshrl.u32 2475754826, %v1299
    %v1303 = vor.u32 %v1301, %v1302
    %v1304 = vshll.u32 2475754826, %v1298
    %v1305 = vshrl.u32 2131351028, %v1299
    %v1306 = vor.u32 %v1304, %v1305
    %v1307 = vshll.u32 2131351028, %v1298
    %v1308 = vshrl.u32 2102212464, %v1299
    %v1309 = vor.u32 %v1307, %v1308
    %v1310 = vshll.u32 2102212464, %v1298
    %v1311 = vshrl.u32 920167782, %v1299
    %v1312 = vor.u32 %v1310, %v1311
    %v1313 = vshll.u32 920167782, %v1298
    %v1314 = vshrl.u32 1326507024, %v1299
    %v1315 = vor.u32 %v1313, %v1314
    %vm1316 = vcmp.lt.s32.totalorder %v1297, 1
    %vm1317 = vcmp.lt.s32.totalorder %v1297, 2
    %vm1318 = vcmp.lt.s32.totalorder %v1297, 3
    %vm1319 = vcmp.lt.s32.totalorder %v1297, 4
    %v1320 = vsel %vm1316, %v1300, %v1303
    %v1321 = vsel %vm1319, %v1309, 2102212464
    %v1322 = vsel %vm1318, %v1306, %v1321
    %v1323 = vsel %vm1317, %v1320, %v1322
    %v1324 = vsel %vm1316, %v1303, %v1306
    %v1325 = vsel %vm1319, %v1312, 920167782
    %v1326 = vsel %vm1318, %v1309, %v1325
    %v1327 = vsel %vm1317, %v1324, %v1326
    %v1328 = vsel %vm1316, %v1306, %v1309
    %v1329 = vsel %vm1319, %v1315, 1326507024
    %v1330 = vsel %vm1318, %v1312, %v1329
    %v1331 = vsel %vm1317, %v1328, %v1330
    %v1332 = vshll.u32 %v1292, 8
    %v1333 = vand.u32 %v1332, 65535
    %v1334 = vshrl.u32 %v1332, 16
    %v1335 = vand.u32 %v1331, 65535
    %v1336 = vshrl.u32 %v1331, 16
    %v1337 = vmul.u32 %v1333, %v1335
    %v1338 = vmul.u32 %v1333, %v1336
    %v1339 = vmul.u32 %v1334, %v1335
    %v1340 = vmul.u32 %v1334, %v1336
    %v1341 = vshll.u32 %v1338, 16
    %v1342 = vshrl.u32 %v1338, 16
    %v1343 = vshll.u32 %v1339, 16
    %v1344 = vshrl.u32 %v1339, 16
    %vm1345 = vc.u32 %v1337, %v1341
    %v1346 = vsel %vm1345, 1, 0
    %v1347 = vadd.s32 %v1337, %v1341
    %v1348 = vadd.s32 %v1340, %v1346
    %vm1349 = vc.u32 %v1347, %v1343
    %v1350 = vsel %vm1349, 1, 0
    %v1351 = vadd.s32 %v1347, %v1343
    %v1352 = vadd.s32 %v1348, %v1350
    %v1353 = vadd.s32 %v1352, %v1342
    %v1354 = vadd.s32 %v1353, %v1344
    %v1355 = vand.u32 %v1332, 65535
    %v1356 = vshrl.u32 %v1332, 16
    %v1357 = vand.u32 %v1327, 65535
    %v1358 = vshrl.u32 %v1327, 16
    %v1359 = vmul.u32 %v1355, %v1357
    %v1360 = vmul.u32 %v1355, %v1358
    %v1361 = vmul.u32 %v1356, %v1357
    %v1362 = vmul.u32 %v1356, %v1358
    %v1363 = vshll.u32 %v1360, 16
    %v1364 = vshrl.u32 %v1360, 16
    %v1365 = vshll.u32 %v1361, 16
    %v1366 = vshrl.u32 %v1361, 16
    %vm1367 = vc.u32 %v1359, %v1363
    %v1368 = vsel %vm1367, 1, 0
    %v1369 = vadd.s32 %v1359, %v1363
    %v1370 = vadd.s32 %v1362, %v1368
    %vm1371 = vc.u32 %v1369, %v1365
    %v1372 = vsel %vm1371, 1, 0
    %v1373 = vadd.s32 %v1369, %v1365
    %v1374 = vadd.s32 %v1370, %v1372
    %v1375 = vadd.s32 %v1374, %v1364
    %v1376 = vadd.s32 %v1375, %v1366
    %v1377 = vmul.u32 %v1332, %v1323
    %v1378 = vadd.s32 %v1354, %v1373
    %vm1379 = vc.u32 %v1354, %v1373
    %v1380 = vadd.s32 %v1376, 1
    %v1381 = vsel %vm1379, %v1380, %v1376
    %v1382 = vadd.s32 %v1377, %v1381
    %v1383 = vadd.s32 %v1382, 536870912
    %v1384 = vshrl.u32 %v1383, 30
    %v1385 = vshll.u32 %v1384, 30
    %v1386 = vsub.s32 %v1382, %v1385
    %vm1387 = vcmp.lt.s32.totalorder %v1386, 0
    %v1388 = vsub.s32 0, %v1386
    %v1389 = vsel %vm1387, %v1388, %v1386
    %v1390 = vclz %v1389
    %v1391 = vsub.s32 %v1390, 2
    %vm1392 = vcmp.gt.s32.totalorder 0, %v1391
    %v1393 = vsel %vm1392, 0, %v1391
    %v1394 = vsub.s32 32, %v1393
    %v1395 = vshll.u32 %v1386, %v1393
    %v1396 = vshrl.u32 %v1378, %v1394
    %v1397 = vor.u32 %v1395, %v1396
    %v1398 = vsub.s32 4294967266, %v1393
    %v1399 = vadd.s32 %v1398, 127
    %v1400 = vshll.u32 %v1399, 23
    %v1401 = vor.u32 4788187, %v1400
    %v1402 = vand.u32 2147483647, %v1401
    %v1404 = vcvt.s32.f32 %v1397
    %v1405 = vmul.f32 %v1404, %v1402
    %v1406 = vxor.u32 %v1405, 2147483648
    %v1407 = vsel %vm1286, %v1406, %v1405
    %v1408 = vsub.s32 4, %v1384
    %v1409 = vsel %vm1286, %v1408, %v1384
    %v1410 = vsel %vm1285, %v503, %v1407
    %v1411 = vsel %vm1285, 0, %v1409
    %v1412 = vmul.f32 %v1410, %v1410
    %v1413 = vmul.f32 %v1412, -0.001358992
    %v1414 = vadd.f32 %v1413, 0.041655596
    %v1415 = vmul.f32 %v1412, %v1414
    %v1416 = vadd.f32 %v1415, -0.4999988
    %v1417 = vmul.f32 %v1412, %v1416
    %v1418 = vadd.f32 1.0, %v1417
    %v1419 = vmul.f32 %v1410, %v1410
    %v1420 = vmul.f32 %v1419, -0.00019511016
    %v1421 = vadd.f32 %v1420, 0.008332121
    %v1422 = vmul.f32 %v1419, %v1421
    %v1423 = vadd.f32 %v1422, -0.16666654
    %v1424 = vmul.f32 %v1419, %v1423
    %v1425 = vadd.f32 %v1424, 1.0
    %v1426 = vmul.f32 %v1425, %v1410
    %vm1427 = vweird.f32 %v503
    %v1428 = vadd.s32 %v1411, 3
    %v1429 = vand.u32 %v1428, 3
    %vm1430 = vcmp.lt.s32.totalorder %v1429, 2
    %vm1431 = vcmp.eq.s32.totalorder %v1429, 0
    %v1432 = vxor.u32 %v1426, 2147483648
    %v1433 = vsel %vm1431, %v1418, %v1432
    %vm1434 = vcmp.eq.s32.totalorder %v1429, 2
    %v1435 = vxor.u32 %v1418, 2147483648
    %v1436 = vsel %vm1434, %v1435, %v1426
    %v1437 = vsel %vm1430, %v1433, %v1436
    %v1438 = vsel %vm1427, nan, %v1437
    %v1439 = vand.u32 2147483647, %v268
    %vm1440 = vcmp.le.f32.partialorder %v1439, 0.7853982
    %vm1441 = vcmp.lt.s32.totalorder %v268, 0
    %v1442 = vand.u32 %v268, 2139095040
    %v1443 = vshrl.u32 %v1442, 23
    %v1444 = vsub.s32 %v1443, 127
    %v1445 = vand.u32 2147483647, %v268
    %v1446 = vand.u32 %v1445, 8388607
    %v1447 = vor.u32 %v1446, 8388608
    %v1448 = vsub.s32 0, %v1447
    %v1449 = vadd.s32 %v1444, 1
    %vm1450 = vcmp.gt.s32.totalorder %v1449, 0
    %v1451 = vsel %vm1450, %v1449, 0
    %v1452 = vshrl.u32 %v1451, 5
    %v1453 = vand.u32 %v1451, 31
    %v1454 = vsub.s32 32, %v1453
    %v1455 = vshrl.u32 683565275, %v1454
    %v1456 = vshll.u32 683565275, %v1453
    %v1457 = vshrl.u32 2475754826, %v1454
    %v1458 = vor.u32 %v1456, %v1457
    %v1459 = vshll.u32 2475754826, %v1453
    %v1460 = vshrl.u32 2131351028, %v1454
    %v1461 = vor.u32 %v1459, %v1460
    %v1462 = vshll.u32 2131351028, %v1453
    %v1463 = vshrl.u32 2102212464, %v1454
    %v1464 = vor.u32 %v1462, %v1463
    %v1465 = vshll.u32 2102212464, %v1453
    %v1466 = vshrl.u32 920167782, %v1454
    %v1467 = vor.u32 %v1465, %v1466
    %v1468 = vshll.u32 920167782, %v1453
    %v1469 = vshrl.u32 1326507024, %v1454
    %v1470 = vor.u32 %v1468, %v1469
    %vm1471 = vcmp.lt.s32.totalorder %v1452, 1
    %vm1472 = vcmp.lt.s32.totalorder %v1452, 2
    %vm1473 = vcmp.lt.s32.totalorder %v1452, 3
    %vm1474 = vcmp.lt.s32.totalorder %v1452, 4
    %v1475 = vsel %vm1471, %v1455, %v1458
    %v1476 = vsel %vm1474, %v1464, 2102212464
    %v1477 = vsel %vm1473, %v1461, %v1476
    %v1478 = vsel %vm1472, %v1475, %v1477
    %v1479 = vsel %vm1471, %v1458, %v1461
    %v1480 = vsel %vm1474, %v1467, 920167782
    %v1481 = vsel %vm1473, %v1464, %v1480
    %v1482 = vsel %vm1472, %v1479, %v1481
    %v1483 = vsel %vm1471, %v1461, %v1464
    %v1484 = vsel %vm1474, %v1470, 1326507024
    %v1485 = vsel %vm1473, %v1467, %v1484
    %v1486 = vsel %vm1472, %v1483, %v1485
    %v1487 = vshll.u32 %v1447, 8
    %v1488 = vand.u32 %v1487, 65535
    %v1489 = vshrl.u32 %v1487, 16
    %v1490 = vand.u32 %v1486, 65535
    %v1491 = vshrl.u32 %v1486, 16
    %v1492 = vmul.u32 %v1488, %v1490
    %v1493 = vmul.u32 %v1488, %v1491
    %v1494 = vmul.u32 %v1489, %v1490
    %v1495 = vmul.u32 %v1489, %v1491
    %v1496 = vshll.u32 %v1493, 16
    %v1497 = vshrl.u32 %v1493, 16
    %v1498 = vshll.u32 %v1494, 16
    %v1499 = vshrl.u32 %v1494, 16
    %vm1500 = vc.u32 %v1492, %v1496
    %v1501 = vsel %vm1500, 1, 0
    %v1502 = vadd.s32 %v1492, %v1496
    %v1503 = vadd.s32 %v1495, %v1501
    %vm1504 = vc.u32 %v1502, %v1498
    %v1505 = vsel %vm1504, 1, 0
    %v1506 = vadd.s32 %v1502, %v1498
    %v1507 = vadd.s32 %v1503, %v1505
    %v1508 = vadd.s32 %v1507, %v1497
    %v1509 = vadd.s32 %v1508, %v1499
    %v1510 = vand.u32 %v1487, 65535
    %v1511 = vshrl.u32 %v1487, 16
    %v1512 = vand.u32 %v1482, 65535
    %v1513 = vshrl.u32 %v1482, 16
    %v1514 = vmul.u32 %v1510, %v1512
    %v1515 = vmul.u32 %v1510, %v1513
    %v1516 = vmul.u32 %v1511, %v1512
    %v1517 = vmul.u32 %v1511, %v1513
    %v1518 = vshll.u32 %v1515, 16
    %v1519 = vshrl.u32 %v1515, 16
    %v1520 = vshll.u32 %v1516, 16
    %v1521 = vshrl.u32 %v1516, 16
    %vm1522 = vc.u32 %v1514, %v1518
    %v1523 = vsel %vm1522, 1, 0
    %v1524 = vadd.s32 %v1514, %v1518
    %v1525 = vadd.s32 %v1517, %v1523
    %vm1526 = vc.u32 %v1524, %v1520
    %v1527 = vsel %vm1526, 1, 0
    %v1528 = vadd.s32 %v1524, %v1520
    %v1529 = vadd.s32 %v1525, %v1527
    %v1530 = vadd.s32 %v1529, %v1519
    %v1531 = vadd.s32 %v1530, %v1521
    %v1532 = vmul.u32 %v1487, %v1478
    %v1533 = vadd.s32 %v1509, %v1528
    %vm1534 = vc.u32 %v1509, %v1528
    %v1535 = vadd.s32 %v1531, 1
    %v1536 = vsel %vm1534, %v1535, %v1531
    %v1537 = vadd.s32 %v1532, %v1536
    %v1538 = vadd.s32 %v1537, 536870912
    %v1539 = vshrl.u32 %v1538, 30
    %v1540 = vshll.u32 %v1539, 30
    %v1541 = vsub.s32 %v1537, %v1540
    %vm1542 = vcmp.lt.s32.totalorder %v1541, 0
    %v1543 = vsub.s32 0, %v1541
    %v1544 = vsel %vm1542, %v1543, %v1541
    %v1545 = vclz %v1544
    %v1546 = vsub.s32 %v1545, 2
    %vm1547 = vcmp.gt.s32.totalorder 0, %v1546
    %v1548 = vsel %vm1547, 0, %v1546
    %v1549 = vsub.s32 32, %v1548
    %v1550 = vshll.u32 %v1541, %v1548
    %v1551 = vshrl.u32 %v1533, %v1549
    %v1552 = vor.u32 %v1550, %v1551
    %v1553 = vsub.s32 4294967266, %v1548
    %v1554 = vadd.s32 %v1553, 127
    %v1555 = vshll.u32 %v1554, 23
    %v1556 = vor.u32 4788187, %v1555
    %v1557 = vand.u32 2147483647, %v1556
    %v1559 = vcvt.s32.f32 %v1552
    %v1560 = vmul.f32 %v1559, %v1557
    %v1561 = vxor.u32 %v1560, 2147483648
    %v1562 = vsel %vm1441, %v1561, %v1560
    %v1563 = vsub.s32 4, %v1539
    %v1564 = vsel %vm1441, %v1563, %v1539
    %v1565 = vsel %vm1440, %v268, %v1562
    %v1566 = vsel %vm1440, 0, %v1564
    %v1567 = vmul.f32 %v1565, %v1565
    %v1568 = vmul.f32 %v1567, -0.001358992
    %v1569 = vadd.f32 %v1568, 0.041655596
    %v1570 = vmul.f32 %v1567, %v1569
    %v1571 = vadd.f32 %v1570, -0.4999988
    %v1572 = vmul.f32 %v1567, %v1571
    %v1573 = vadd.f32 1.0, %v1572
    %v1574 = vmul.f32 %v1565, %v1565
    %v1575 = vmul.f32 %v1574, -0.00019511016
    %v1576 = vadd.f32 %v1575, 0.008332121
    %v1577 = vmul.f32 %v1574, %v1576
    %v1578 = vadd.f32 %v1577, -0.16666654
    %v1579 = vmul.f32 %v1574, %v1578
    %v1580 = vadd.f32 %v1579, 1.0
    %v1581 = vmul.f32 %v1580, %v1565
    %vm1582 = vweird.f32 %v268
    %v1583 = vadd.s32 %v1566, 3
    %v1584 = vand.u32 %v1583, 3
    %vm1585 = vcmp.lt.s32.totalorder %v1584, 2
    %vm1586 = vcmp.eq.s32.totalorder %v1584, 0
    %v1587 = vxor.u32 %v1581, 2147483648
    %v1588 = vsel %vm1586, %v1573, %v1587
    %vm1589 = vcmp.eq.s32.totalorder %v1584, 2
    %v1590 = vxor.u32 %v1573, 2147483648
    %v1591 = vsel %vm1589, %v1590, %v1581
    %v1592 = vsel %vm1585, %v1588, %v1591
    %v1593 = vsel %vm1582, nan, %v1592
    %v1594 = vand.u32 2147483647, %v507
    %vm1595 = vcmp.le.f32.partialorder %v1594, 0.7853982
    %vm1596 = vcmp.lt.s32.totalorder %v507, 0
    %v1597 = vand.u32 %v507, 2139095040
    %v1598 = vshrl.u32 %v1597, 23
    %v1599 = vsub.s32 %v1598, 127
    %v1600 = vand.u32 2147483647, %v507
    %v1601 = vand.u32 %v1600, 8388607
    %v1602 = vor.u32 %v1601, 8388608
    %v1603 = vsub.s32 0, %v1602
    %v1604 = vadd.s32 %v1599, 1
    %vm1605 = vcmp.gt.s32.totalorder %v1604, 0
    %v1606 = vsel %vm1605, %v1604, 0
    %v1607 = vshrl.u32 %v1606, 5
    %v1608 = vand.u32 %v1606, 31
    %v1609 = vsub.s32 32, %v1608
    %v1610 = vshrl.u32 683565275, %v1609
    %v1611 = vshll.u32 683565275, %v1608
    %v1612 = vshrl.u32 2475754826, %v1609
    %v1613 = vor.u32 %v1611, %v1612
    %v1614 = vshll.u32 2475754826, %v1608
    %v1615 = vshrl.u32 2131351028, %v1609
    %v1616 = vor.u32 %v1614, %v1615
    %v1617 = vshll.u32 2131351028, %v1608
    %v1618 = vshrl.u32 2102212464, %v1609
    %v1619 = vor.u32 %v1617, %v1618
    %v1620 = vshll.u32 2102212464, %v1608
    %v1621 = vshrl.u32 920167782, %v1609
    %v1622 = vor.u32 %v1620, %v1621
    %v1623 = vshll.u32 920167782, %v1608
    %v1624 = vshrl.u32 1326507024, %v1609
    %v1625 = vor.u32 %v1623, %v1624
    %vm1626 = vcmp.lt.s32.totalorder %v1607, 1
    %vm1627 = vcmp.lt.s32.totalorder %v1607, 2
    %vm1628 = vcmp.lt.s32.totalorder %v1607, 3
    %vm1629 = vcmp.lt.s32.totalorder %v1607, 4
    %v1630 = vsel %vm1626, %v1610, %v1613
    %v1631 = vsel %vm1629, %v1619, 2102212464
    %v1632 = vsel %vm1628, %v1616, %v1631
    %v1633 = vsel %vm1627, %v1630, %v1632
    %v1634 = vsel %vm1626, %v1613, %v1616
    %v1635 = vsel %vm1629, %v1622, 920167782
    %v1636 = vsel %vm1628, %v1619, %v1635
    %v1637 = vsel %vm1627, %v1634, %v1636
    %v1638 = vsel %vm1626, %v1616, %v1619
    %v1639 = vsel %vm1629, %v1625, 1326507024
    %v1640 = vsel %vm1628, %v1622, %v1639
    %v1641 = vsel %vm1627, %v1638, %v1640
    %v1642 = vshll.u32 %v1602, 8
    %v1643 = vand.u32 %v1642, 65535
    %v1644 = vshrl.u32 %v1642, 16
    %v1645 = vand.u32 %v1641, 65535
    %v1646 = vshrl.u32 %v1641, 16
    %v1647 = vmul.u32 %v1643, %v1645
    %v1648 = vmul.u32 %v1643, %v1646
    %v1649 = vmul.u32 %v1644, %v1645
    %v1650 = vmul.u32 %v1644, %v1646
    %v1651 = vshll.u32 %v1648, 16
    %v1652 = vshrl.u32 %v1648, 16
    %v1653 = vshll.u32 %v1649, 16
    %v1654 = vshrl.u32 %v1649, 16
    %vm1655 = vc.u32 %v1647, %v1651
    %v1656 = vsel %vm1655, 1, 0
    %v1657 = vadd.s32 %v1647, %v1651
    %v1658 = vadd.s32 %v1650, %v1656
    %vm1659 = vc.u32 %v1657, %v1653
    %v1660 = vsel %vm1659, 1, 0
    %v1661 = vadd.s32 %v1657, %v1653
    %v1662 = vadd.s32 %v1658, %v1660
    %v1663 = vadd.s32 %v1662, %v1652
    %v1664 = vadd.s32 %v1663, %v1654
    %v1665 = vand.u32 %v1642, 65535
    %v1666 = vshrl.u32 %v1642, 16
    %v1667 = vand.u32 %v1637, 65535
    %v1668 = vshrl.u32 %v1637, 16
    %v1669 = vmul.u32 %v1665, %v1667
    %v1670 = vmul.u32 %v1665, %v1668
    %v1671 = vmul.u32 %v1666, %v1667
    %v1672 = vmul.u32 %v1666, %v1668
    %v1673 = vshll.u32 %v1670, 16
    %v1674 = vshrl.u32 %v1670, 16
    %v1675 = vshll.u32 %v1671, 16
    %v1676 = vshrl.u32 %v1671, 16
    %vm1677 = vc.u32 %v1669, %v1673
    %v1678 = vsel %vm1677, 1, 0
    %v1679 = vadd.s32 %v1669, %v1673
    %v1680 = vadd.s32 %v1672, %v1678
    %vm1681 = vc.u32 %v1679, %v1675
    %v1682 = vsel %vm1681, 1, 0
    %v1683 = vadd.s32 %v1679, %v1675
    %v1684 = vadd.s32 %v1680, %v1682
    %v1685 = vadd.s32 %v1684, %v1674
    %v1686 = vadd.s32 %v1685, %v1676
    %v1687 = vmul.u32 %v1642, %v1633
    %v1688 = vadd.s32 %v1664, %v1683
    %vm1689 = vc.u32 %v1664, %v1683
    %v1690 = vadd.s32 %v1686, 1
    %v1691 = vsel %vm1689, %v1690, %v1686
    %v1692 = vadd.s32 %v1687, %v1691
    %v1693 = vadd.s32 %v1692, 536870912
    %v1694 = vshrl.u32 %v1693, 30
    %v1695 = vshll.u32 %v1694, 30
    %v1696 = vsub.s32 %v1692, %v1695
    %vm1697 = vcmp.lt.s32.totalorder %v1696, 0
    %v1698 = vsub.s32 0, %v1696
    %v1699 = vsel %vm1697, %v1698, %v1696
    %v1700 = vclz %v1699
    %v1701 = vsub.s32 %v1700, 2
    %vm1702 = vcmp.gt.s32.totalorder 0, %v1701
    %v1703 = vsel %vm1702, 0, %v1701
    %v1704 = vsub.s32 32, %v1703
    %v1705 = vshll.u32 %v1696, %v1703
    %v1706 = vshrl.u32 %v1688, %v1704
    %v1707 = vor.u32 %v1705, %v1706
    %v1708 = vsub.s32 4294967266, %v1703
    %v1709 = vadd.s32 %v1708, 127
    %v1710 = vshll.u32 %v1709, 23
    %v1711 = vor.u32 4788187, %v1710
    %v1712 = vand.u32 2147483647, %v1711
    %v1714 = vcvt.s32.f32 %v1707
    %v1715 = vmul.f32 %v1714, %v1712
    %v1716 = vxor.u32 %v1715, 2147483648
    %v1717 = vsel %vm1596, %v1716, %v1715
    %v1718 = vsub.s32 4, %v1694
    %v1719 = vsel %vm1596, %v1718, %v1694
    %v1720 = vsel %vm1595, %v507, %v1717
    %v1721 = vsel %vm1595, 0, %v1719
    %v1722 = vmul.f32 %v1720, %v1720
    %v1723 = vmul.f32 %v1722, -0.001358992
    %v1724 = vadd.f32 %v1723, 0.041655596
    %v1725 = vmul.f32 %v1722, %v1724
    %v1726 = vadd.f32 %v1725, -0.4999988
    %v1727 = vmul.f32 %v1722, %v1726
    %v1728 = vadd.f32 1.0, %v1727
    %v1729 = vmul.f32 %v1720, %v1720
    %v1730 = vmul.f32 %v1729, -0.00019511016
    %v1731 = vadd.f32 %v1730, 0.008332121
    %v1732 = vmul.f32 %v1729, %v1731
    %v1733 = vadd.f32 %v1732, -0.16666654
    %v1734 = vmul.f32 %v1729, %v1733
    %v1735 = vadd.f32 %v1734, 1.0
    %v1736 = vmul.f32 %v1735, %v1720
    %vm1737 = vweird.f32 %v507
    %v1738 = vadd.s32 %v1721, 3
    %v1739 = vand.u32 %v1738, 3
    %vm1740 = vcmp.lt.s32.totalorder %v1739, 2
    %vm1741 = vcmp.eq.s32.totalorder %v1739, 0
    %v1742 = vxor.u32 %v1736, 2147483648
    %v1743 = vsel %vm1741, %v1728, %v1742
    %vm1744 = vcmp.eq.s32.totalorder %v1739, 2
    %v1745 = vxor.u32 %v1728, 2147483648
    %v1746 = vsel %vm1744, %v1745, %v1736
    %v1747 = vsel %vm1740, %v1743, %v1746
    %v1748 = vsel %vm1737, nan, %v1747
    %v1749 = vadd.f32 %v663, %v818
    %1750 = vadd.xlane.f32.xlu0 %v1749
    %v1751 = vpop.xlane.xlu0 %1750
    %v1752 = vadd.f32 %v973, %v1128
    %1753 = vadd.xlane.f32.xlu0 %v1752
    %v1754 = vpop.xlane.xlu0 %1753
    %v1755 = vadd.f32 %v1283, %v1438
    %1756 = vadd.xlane.f32.xlu0 %v1755
    %v1757 = vpop.xlane.xlu0 %1756
    %v1758 = vadd.f32 %v1593, %v1748
    %1759 = vadd.xlane.f32.xlu0 %v1758
    %v1760 = vpop.xlane.xlu0 %1759
    %v1761 = vmul.f32 %v1751, 0.00390625
    %v1762 = vmul.f32 %v1754, 0.00390625
    %v1763 = vmul.f32 %v1757, 0.00390625
    %v1764 = vmul.f32 %v1760, 0.00390625
    %v1765 = vmul.f32 %v663, %v663
    %v1766 = vmul.f32 %v818, %v818
    %v1767 = vmul.f32 %v973, %v973
    %v1768 = vmul.f32 %v1128, %v1128
    %v1769 = vmul.f32 %v1283, %v1283
    %v1770 = vmul.f32 %v1438, %v1438
    %v1771 = vmul.f32 %v1593, %v1593
    %v1772 = vmul.f32 %v1748, %v1748
    %v1773 = vadd.f32 %v1765, %v1766
    %1774 = vadd.xlane.f32.xlu0 %v1773
    %v1775 = vpop.xlane.xlu0 %1774
    %v1776 = vadd.f32 %v1767, %v1768
    %1777 = vadd.xlane.f32.xlu0 %v1776
    %v1778 = vpop.xlane.xlu0 %1777
    %v1779 = vadd.f32 %v1769, %v1770
    %1780 = vadd.xlane.f32.xlu0 %v1779
    %v1781 = vpop.xlane.xlu0 %1780
    %v1782 = vadd.f32 %v1771, %v1772
    %1783 = vadd.xlane.f32.xlu0 %v1782
    %v1784 = vpop.xlane.xlu0 %1783
    %v1785 = vmul.f32 %v1775, 0.00390625
    %v1786 = vmul.f32 %v1778, 0.00390625
    %v1787 = vmul.f32 %v1781, 0.00390625
    %v1788 = vmul.f32 %v1784, 0.00390625
    %v1789 = vmul.f32 %v1761, %v1761
    %v1790 = vmul.f32 %v1762, %v1762
    %v1791 = vmul.f32 %v1763, %v1763
    %v1792 = vmul.f32 %v1764, %v1764
    %v1793 = vsub.f32 %v1785, %v1789
    %v1794 = vsub.f32 %v1786, %v1790
    %v1795 = vsub.f32 %v1787, %v1791
    %v1796 = vsub.f32 %v1788, %v1792
    %v1797 = vsub.f32 %v663, %v1761
    %v1798 = vsub.f32 %v818, %v1761
    %v1799 = vsub.f32 %v973, %v1762
    %v1800 = vsub.f32 %v1128, %v1762
    %v1801 = vsub.f32 %v1283, %v1763
    %v1802 = vsub.f32 %v1438, %v1763
    %v1803 = vsub.f32 %v1593, %v1764
    %v1804 = vsub.f32 %v1748, %v1764
    %v1805 = vadd.f32 %v1793, 1e-12
    %v1806 = vadd.f32 %v1794, 1e-12
    %v1807 = vadd.f32 %v1795, 1e-12
    %v1808 = vadd.f32 %v1796, 1e-12
    %v1809 = vrsqrt.pop %v1805
    %v1810 = vmul.f32 %v1809, %v1805
    %v1811 = vmul.f32 %v1810, %v1809
    %v1812 = vmul.f32 0.5, %v1811
    %v1813 = vsub.f32 1.5, %v1812
    %v1814 = vmul.f32 %v1809, %v1813
    %vm1815 = vweird.f32 %v1805
    %vm1816 = vweird.f32 %v1809
    %vm1817 = vmor %vm1815, %vm1816
    %v1818 = vsel %vm1817, %v1809, %v1814
    %v1819 = vrsqrt.pop %v1806
    %v1820 = vmul.f32 %v1819, %v1806
    %v1821 = vmul.f32 %v1820, %v1819
    %v1822 = vmul.f32 0.5, %v1821
    %v1823 = vsub.f32 1.5, %v1822
    %v1824 = vmul.f32 %v1819, %v1823
    %vm1825 = vweird.f32 %v1806
    %vm1826 = vweird.f32 %v1819
    %vm1827 = vmor %vm1825, %vm1826
    %v1828 = vsel %vm1827, %v1819, %v1824
    %v1829 = vrsqrt.pop %v1807
    %v1830 = vmul.f32 %v1829, %v1807
    %v1831 = vmul.f32 %v1830, %v1829
    %v1832 = vmul.f32 0.5, %v1831
    %v1833 = vsub.f32 1.5, %v1832
    %v1834 = vmul.f32 %v1829, %v1833
    %vm1835 = vweird.f32 %v1807
    %vm1836 = vweird.f32 %v1829
    %vm1837 = vmor %vm1835, %vm1836
    %v1838 = vsel %vm1837, %v1829, %v1834
    %v1839 = vrsqrt.pop %v1808
    %v1840 = vmul.f32 %v1839, %v1808
    %v1841 = vmul.f32 %v1840, %v1839
    %v1842 = vmul.f32 0.5, %v1841
    %v1843 = vsub.f32 1.5, %v1842
    %v1844 = vmul.f32 %v1839, %v1843
    %vm1845 = vweird.f32 %v1808
    %vm1846 = vweird.f32 %v1839
    %vm1847 = vmor %vm1845, %vm1846
    %v1848 = vsel %vm1847, %v1839, %v1844
    %v1849 = vmul.f32 %v1797, %v1818
    %v1850 = vmul.f32 %v1798, %v1818
    %v1851 = vmul.f32 %v1799, %v1828
    %v1852 = vmul.f32 %v1800, %v1828
    %v1853 = vmul.f32 %v1801, %v1838
    %v1854 = vmul.f32 %v1802, %v1838
    %v1855 = vmul.f32 %v1803, %v1848
    %v1856 = vmul.f32 %v1804, %v1848
    %1857 = vst [vmem:[#allocation2] sm:$0xff] %v1849
    %1858 = vst [vmem:[#allocation2 + $0x8] sm:$0xff] %v1850
    %1859 = vst [vmem:[#allocation2 + $0x10] sm:$0xff] %v1851
    %1860 = vst [vmem:[#allocation2 + $0x18] sm:$0xff] %v1852
    %1861 = vst [vmem:[#allocation2 + $0x20] sm:$0xff] %v1853
    %1862 = vst [vmem:[#allocation2 + $0x28] sm:$0xff] %v1854
    %1863 = vst [vmem:[#allocation2 + $0x30] sm:$0xff] %v1855
    %1864 = vst [vmem:[#allocation2 + $0x38] sm:$0xff] %v1856
    // Predicated region
    $region10: #{tpu_custom_call.1} parent=1 // pred_check
      _
    $region11: #{tpu_custom_call.1} parent=1 // pred_check_branch
      %1866 = sbr.rel (0) target = $region13
    $region12: #{tpu_custom_call.1} parent=1 // pred_region
      %1868 = vsyncadd [#allocation3], 0
      %s1869 = sshll.u32 [#allocation2], 4
      %s1870 = int_to_ptr.vmem [resolvable:$true] %s1869
      %s1871 = sshll.u32 %s2, 4
      %s1872 = int_to_ptr.hbm [resolvable:$true] %s1871
      %1877 = dma.vmem_to_hbm [thread:$0]  %s1870, 1024, %s1872, [#allocation3], 256, 256, 16
    $region13: #{tpu_custom_call.1} parent=1 // pred_fallthru
      _
    // Predicated region
    $region14: #{tpu_custom_call.1} parent=1 // pred_check
      _
    $region15: #{tpu_custom_call.1} parent=1 // pred_check_branch
      %1879 = sbr.rel (0) target = $region17
    $region16: #{tpu_custom_call.1} parent=1 // pred_region
      %1881 = dma.done [#allocation3], 1024
    $region17: #{tpu_custom_call.1} parent=1 // pred_fallthru
      _
    %1882 = vsyncpa [#allocation3], 1

</llo_original>
